<compile_context>
chip_gen: v7x
topology: tpu7x:2x2x1
jax: 0.10.0
libtpu: 0.0.40
codegen_flags: <defaults>
</compile_context>

<pallas_src>
import math

import jax
import jax.numpy as jnp
from jax import lax
from jax.experimental import pallas as pl
from jax.experimental.pallas import tpu as pltpu

INPUT_SIZE = 3
HIDDEN = 12                  # self.k
SEQ_LEN = 1 * 24 * 3         # 72 timesteps (required by the reshape)
LIN_IN = HIDDEN * SEQ_LEN    # 864
LIN_OUT = 3 * SEQ_LEN        # 216
UNROLL = 8                   # steps per unrolled block (72 = 9 * 8)

_VMEM_SPEC = pl.BlockSpec(memory_space=pltpu.MemorySpace.VMEM)


# ---------------------------------------------------------------------------
# Fused kernel: wavefront 2-layer LSTM recurrence + sigmoid + on-the-fly Linear.
# ---------------------------------------------------------------------------
def _net_kernel(x_ref,      # (T+1, B, 3)   time-major input, one zero-padded step
                wx_ref,     # (3, 8H)       x -> both layers' gates (layer-2 cols 0)
                bias_ref,   # (1, 8H)       [b1 | b2], gate-interleaved
                wbig_ref,   # (2H, 8H)      [[Whh1, Wih2], [0, Whh2]], interleaved
                w2_ref,     # (T/U, U*H, 216) final Linear weight, block-major
                blin_ref,   # (1, 216)
                out_ref):   # (B, 216)
    T1, B, _ = x_ref.shape
    G2 = wbig_ref.shape[0]              # 2H = 24 (both layers' h/c side by side)
    H = G2 // 2
    NBLK, UG, NOUT = w2_ref.shape
    U = UG // H                         # unroll factor
    assert T1 - 1 == NBLK * U, (T1, NBLK, U)

    wx = wx_ref[...]
    bias = bias_ref[...]
    wbig = wbig_ref[...]

    # Lane mask selecting layer-1's half of the fused (B, 2H) state.
    l1mask = (lax.broadcasted_iota(jnp.int32, (1, G2), 1) < H).astype(jnp.float32)

    def lstm_act(gates, c):
        # Fused gate layout: [i1 i2 | f1 f2 | g1 g2 | o1 o2] (each block 2H lanes).
        # The (B, 8H) gates fit one vreg, so a full-width sigmoid + tanh push
        # plus tanh(c_new) = 3 EUP pushes per step for BOTH layers; c/h for
        # both layers stay a single (B, 2H) value (24-lane aligned slices).
        sg = jax.nn.sigmoid(gates)
        tg = jnp.tanh(gates)
        i = sg[:, 0 * G2:1 * G2]
        f = sg[:, 1 * G2:2 * G2]
        g = tg[:, 2 * G2:3 * G2]
        o = sg[:, 3 * G2:4 * G2]
        c_new = f * c + i * g
        h_new = o * jnp.tanh(c_new)
        return h_new, c_new

    def xgates(t):
        # Off-chain: depends only on the input, never on the recurrent carry.
        return jnp.dot(x_ref[t], wx, preferred_element_type=jnp.float32) + bias

    # ---- Prologue: layer-1 cell at t = 0 (recurrent term is zero, so no MXU
    # dot); the layer-2 half of the result is discarded via the lane mask.
    h0, c0 = lstm_act(xgates(0), jnp.zeros((B, G2), jnp.float32))
    h = h0 * l1mask                     # [h1_0 | 0]
    c = c0 * l1mask                     # [c1_0 | 0]

    # ---- Main wavefront loop: at step t, layer 1 runs at time t+1 and layer 2
    # at time t, so every step has exactly ONE on-chain (B,2H)@(2H,8H) dot and
    # one sigmoid/tanh/tanh chain for both layers.
    def body(blk, carry):
        h, c, y = carry
        t0 = pl.multiple_of(blk * U, U)
        h2s = []
        for u in range(U):              # static unroll -> visible to LLO scheduler
            gates = xgates(t0 + u + 1) + jnp.dot(
                h, wbig, preferred_element_type=jnp.float32)
            h, c = lstm_act(gates, c)   # h = [h1_{t+1} | h2_t]
            h2s.append(h[:, H:G2])      # h2_t
        # Fused final Linear, batched per block: one sigmoid push + one
        # off-chain (B, U*H) @ (U*H, 216) MXU dot per U steps.
        h2cat = jnp.concatenate(h2s, axis=1)
        y = y + jnp.dot(jax.nn.sigmoid(h2cat), w2_ref[blk],
                        preferred_element_type=jnp.float32)
        return h, c, y

    y0 = jnp.zeros((B, NOUT), jnp.float32)
    _, _, y = lax.fori_loop(0, NBLK, body, (h, c, y0))
    out_ref[...] = y + blin_ref[...]


def net_pallas(x_tm, params, batch):
    return pl.pallas_call(
        _net_kernel,
        out_shape=jax.ShapeDtypeStruct((batch, LIN_OUT), jnp.float32),
        in_specs=[_VMEM_SPEC] * 6,
        out_specs=_VMEM_SPEC,
    )(x_tm, params["wx"], params["bias"], params["wbig"],
      params["w2_blk"], params["b_lin"])


@jax.jit
def net_forward(x_bti, params):
    # x_bti: (B, T, 3), batch-first, matching the PyTorch module.
    B, T, _ = x_bti.shape
    # Time-major + one zero-padded trailing step (the wavefront's layer-1 half
    # reads x_{t+1}; the final read is discarded).  ~0.6 KB of data movement;
    # the input projection itself is fused into the kernel.
    x_tm = jnp.concatenate(
        [jnp.transpose(x_bti, (1, 0, 2)),
         jnp.zeros((1, B, INPUT_SIZE), x_bti.dtype)], axis=0)
    return net_pallas(x_tm, params, B)                        # (B, 216)


# ---------------------------------------------------------------------------
# Parameter init (PyTorch shapes / uniform ranges) + packed kernel weights.
# ---------------------------------------------------------------------------
def _interleave_gates(a1, a2):
    # a1, a2: (..., 4H) in PyTorch gate order [i f g o]
    # -> (..., 8H) laid out [i1 i2 | f1 f2 | g1 g2 | o1 o2]
    parts = []
    for k in range(4):
        parts.append(a1[..., k * HIDDEN:(k + 1) * HIDDEN])
        parts.append(a2[..., k * HIDDEN:(k + 1) * HIDDEN])
    return jnp.concatenate(parts, axis=-1)


def init_params(key):
    ks = jax.random.split(key, 10)
    s = 1.0 / math.sqrt(HIDDEN)
    u = lambda k, shape, lim: jax.random.uniform(k, shape, jnp.float32, -lim, lim)

    wih1 = u(ks[0], (4 * HIDDEN, INPUT_SIZE), s)
    whh1 = u(ks[1], (4 * HIDDEN, HIDDEN), s)
    bih1 = u(ks[2], (4 * HIDDEN,), s)
    bhh1 = u(ks[3], (4 * HIDDEN,), s)
    wih2 = u(ks[4], (4 * HIDDEN, HIDDEN), s)
    whh2 = u(ks[5], (4 * HIDDEN, HIDDEN), s)
    bih2 = u(ks[6], (4 * HIDDEN,), s)
    bhh2 = u(ks[7], (4 * HIDDEN,), s)

    s2 = 1.0 / math.sqrt(LIN_IN)
    w2 = u(ks[8], (LIN_OUT, LIN_IN), s2)
    bl = u(ks[9], (LIN_OUT,), s2)

    b1 = bih1 + bhh1
    b2 = bih2 + bhh2
    w2_t = w2.T                                         # (864, 216)

    zeros_x = jnp.zeros((INPUT_SIZE, 4 * HIDDEN), jnp.float32)
    zeros_h = jnp.zeros((HIDDEN, 4 * HIDDEN), jnp.float32)

    wx = _interleave_gates(wih1.T, zeros_x)             # (3, 96)
    bias = _interleave_gates(b1[None, :], b2[None, :])  # (1, 96)
    wbig = jnp.concatenate(
        [_interleave_gates(whh1.T, wih2.T),             # h1 rows
         _interleave_gates(zeros_h, whh2.T)],           # h2 rows
        axis=0)                                         # (24, 96)

    return dict(
        # Reference (unfused) parameters.
        wih1_t=wih1.T, whh1_t=whh1.T, b1=b1[None, :],
        wih2_t=wih2.T, whh2_t=whh2.T, b2=b2[None, :],
        w2_t=w2_t,
        # Packed kernel parameters.
        wx=wx, bias=bias, wbig=wbig,
        w2_blk=w2_t.reshape(SEQ_LEN // UNROLL, UNROLL * HIDDEN, LIN_OUT),
        b_lin=bl[None, :],
    )


# ---------------------------------------------------------------------------
# Pure-JAX reference (original, un-fused formulation) used as correctness check.
# ---------------------------------------------------------------------------
def net_forward_ref(x_bti, params):
    B = x_bti.shape[0]
    H = HIDDEN

    def cell(x_t, h, c, wih, whh, b):
        g = x_t @ wih + h @ whh + b
        i = jax.nn.sigmoid(g[:, 0 * H:1 * H])
        f = jax.nn.sigmoid(g[:, 1 * H:2 * H])
        gg = jnp.tanh(g[:, 2 * H:3 * H])
        o = jax.nn.sigmoid(g[:, 3 * H:4 * H])
        c = f * c + i * gg
        return o * jnp.tanh(c), c

    def step(carry, x_t):
        h1, c1, h2, c2 = carry
        h1, c1 = cell(x_t, h1, c1, params["wih1_t"], params["whh1_t"], params["b1"])
        h2, c2 = cell(h1, h2, c2, params["wih2_t"], params["whh2_t"], params["b2"])
        return (h1, c1, h2, c2), jax.nn.sigmoid(h2)

    z = jnp.zeros((B, H), jnp.float32)
    _, ys = lax.scan(step, (z, z, z, z), jnp.transpose(x_bti, (1, 0, 2)))
    flat = jnp.transpose(ys, (1, 0, 2)).reshape(B, -1)
    return flat @ params["w2_t"] + params["b_lin"]


if __name__ == "__main__":
    B = 2
    params = init_params(jax.random.PRNGKey(42))
    x = jax.random.normal(jax.random.PRNGKey(0), (B, SEQ_LEN, INPUT_SIZE),
                          dtype=jnp.float32)

    out = net_forward(x, params)
    jax.block_until_ready(out)

    ref = net_forward_ref(x, params)
    assert out.shape == (B, LIN_OUT), out.shape
    err = float(jnp.max(jnp.abs(out - ref)))
    assert err < 1e-4, err

    print("KERNEL_OK")
</pallas_src>

<mosaic_0001>
module attributes {stable_mosaic.version = 11 : i64} {
  func.func @_net_kernel(%arg0: memref<73x2x3xf32, #tpu.memory_space<vmem>>, %arg1: memref<3x96xf32, #tpu.memory_space<vmem>>, %arg2: memref<1x96xf32, #tpu.memory_space<vmem>>, %arg3: memref<24x96xf32, #tpu.memory_space<vmem>>, %arg4: memref<9x96x216xf32, #tpu.memory_space<vmem>>, %arg5: memref<1x216xf32, #tpu.memory_space<vmem>>, %arg6: memref<2x216xf32, #tpu.memory_space<vmem>>) attributes {dimension_semantics = [], scalar_prefetch = 0 : i64, scratch_operands = 0 : i64, tpu.core_type = #tpu.core_type<tc>} {
    %c0 = arith.constant 0 : index
    %c0_0 = arith.constant 0 : index
    %0 = vector.load %arg1[%c0, %c0_0] : memref<3x96xf32, #tpu.memory_space<vmem>>, vector<3x96xf32>
    %c0_1 = arith.constant 0 : index
    %c0_2 = arith.constant 0 : index
    %1 = vector.load %arg2[%c0_1, %c0_2] : memref<1x96xf32, #tpu.memory_space<vmem>>, vector<1x96xf32>
    %c0_3 = arith.constant 0 : index
    %c0_4 = arith.constant 0 : index
    %2 = vector.load %arg3[%c0_3, %c0_4] : memref<24x96xf32, #tpu.memory_space<vmem>>, vector<24x96xf32>
    %3 = tpu.iota {dimensions = array<i32: 1>} : vector<1x24xi32>
    %c12_i32 = arith.constant 12 : i32
    %4 = vector.broadcast %c12_i32 : i32 to vector<1x24xi32>
    %5 = arith.cmpi slt, %3, %4 : vector<1x24xi32>
    %6 = arith.extui %5 : vector<1x24xi1> to vector<1x24xi32>
    %7 = arith.sitofp %6 : vector<1x24xi32> to vector<1x24xf32>
    %c0_5 = arith.constant 0 : index
    %c0_6 = arith.constant 0 : index
    %c0_7 = arith.constant 0 : index
    %8 = vector.load %arg0[%c0_5, %c0_6, %c0_7] : memref<73x2x3xf32, #tpu.memory_space<vmem>>, vector<1x2x3xf32>
    %9 = vector.shape_cast %8 : vector<1x2x3xf32> to vector<2x3xf32>
    %cst = arith.constant dense<0.000000e+00> : vector<2x96xf32>
    %10 = tpu.matmul %9, %0, %cst {dimension_numbers = #tpu.dot_dimension_numbers<[1], [0], [0], [1], [0, 0, 1, 1], [], []>} : vector<2x3xf32>, vector<3x96xf32>, vector<2x96xf32> -> vector<2x96xf32>
    %11 = vector.broadcast %1 : vector<1x96xf32> to vector<2x96xf32>
    %12 = arith.addf %10, %11 : vector<2x96xf32>
    %cst_8 = arith.constant 0.000000e+00 : f32
    %13 = vector.broadcast %cst_8 : f32 to vector<2x24xf32>
    %14 = arith.negf %12 : vector<2x96xf32>
    %15 = math.exp %14 : vector<2x96xf32>
    %cst_9 = arith.constant 1.000000e+00 : f32
    %16 = vector.broadcast %cst_9 : f32 to vector<2x96xf32>
    %17 = arith.addf %16, %15 : vector<2x96xf32>
    %18 = arith.divf %16, %17 : vector<2x96xf32>
    %19 = math.tanh %12 : vector<2x96xf32>
    %20 = vector.extract_strided_slice %18 {offsets = [0, 0], sizes = [2, 24], strides = [1, 1]} : vector<2x96xf32> to vector<2x24xf32>
    %21 = vector.extract_strided_slice %18 {offsets = [0, 24], sizes = [2, 24], strides = [1, 1]} : vector<2x96xf32> to vector<2x24xf32>
    %22 = vector.extract_strided_slice %19 {offsets = [0, 48], sizes = [2, 24], strides = [1, 1]} : vector<2x96xf32> to vector<2x24xf32>
    %23 = vector.extract_strided_slice %18 {offsets = [0, 72], sizes = [2, 24], strides = [1, 1]} : vector<2x96xf32> to vector<2x24xf32>
    %24 = arith.mulf %21, %13 : vector<2x24xf32>
    %25 = arith.mulf %20, %22 : vector<2x24xf32>
    %26 = arith.addf %24, %25 : vector<2x24xf32>
    %27 = math.tanh %26 : vector<2x24xf32>
    %28 = arith.mulf %23, %27 : vector<2x24xf32>
    %29 = vector.broadcast %7 : vector<1x24xf32> to vector<2x24xf32>
    %30 = arith.mulf %28, %29 : vector<2x24xf32>
    %31 = vector.broadcast %7 : vector<1x24xf32> to vector<2x24xf32>
    %32 = arith.mulf %26, %31 : vector<2x24xf32>
    %cst_10 = arith.constant 0.000000e+00 : f32
    %33 = vector.broadcast %cst_10 : f32 to vector<2x216xf32>
    %c0_i32 = arith.constant 0 : i32
    %c9_i32 = arith.constant 9 : i32
    %34 = arith.addi %c0_i32, %c9_i32 : i32
    %c1_i32 = arith.constant 1 : i32
    %35:3 = scf.for %arg7 = %c0_i32 to %34 step %c1_i32 iter_args(%arg8 = %30, %arg9 = %32, %arg10 = %33) -> (vector<2x24xf32>, vector<2x24xf32>, vector<2x216xf32>)  : i32 {
      %c8_i32 = arith.constant 8 : i32
      %40 = arith.muli %arg7, %c8_i32 : i32
      %41 = tpu.assume_multiple %40, 8 : i32
      %c0_i32_16 = arith.constant 0 : i32
      %42 = arith.addi %41, %c0_i32_16 : i32
      %c1_i32_17 = arith.constant 1 : i32
      %43 = arith.addi %42, %c1_i32_17 : i32
      %44 = arith.index_cast %43 : i32 to index
      %c0_18 = arith.constant 0 : index
      %c0_19 = arith.constant 0 : index
      %45 = vector.load %arg0[%44, %c0_18, %c0_19] : memref<73x2x3xf32, #tpu.memory_space<vmem>>, vector<1x2x3xf32>
      %46 = vector.shape_cast %45 : vector<1x2x3xf32> to vector<2x3xf32>
      %cst_20 = arith.constant dense<0.000000e+00> : vector<2x96xf32>
      %47 = tpu.matmul %46, %0, %cst_20 {dimension_numbers = #tpu.dot_dimension_numbers<[1], [0], [0], [1], [0, 0, 1, 1], [], []>} : vector<2x3xf32>, vector<3x96xf32>, vector<2x96xf32> -> vector<2x96xf32>
      %48 = vector.broadcast %1 : vector<1x96xf32> to vector<2x96xf32>
      %49 = arith.addf %47, %48 : vector<2x96xf32>
      %cst_21 = arith.constant dense<0.000000e+00> : vector<2x96xf32>
      %50 = tpu.matmul %arg8, %2, %cst_21 {dimension_numbers = #tpu.dot_dimension_numbers<[1], [0], [0], [1], [0, 0, 1, 1], [], []>} : vector<2x24xf32>, vector<24x96xf32>, vector<2x96xf32> -> vector<2x96xf32>
      %51 = arith.addf %49, %50 : vector<2x96xf32>
      %52 = arith.negf %51 : vector<2x96xf32>
      %53 = math.exp %52 : vector<2x96xf32>
      %cst_22 = arith.constant 1.000000e+00 : f32
      %54 = vector.broadcast %cst_22 : f32 to vector<2x96xf32>
      %55 = arith.addf %54, %53 : vector<2x96xf32>
      %56 = arith.divf %54, %55 : vector<2x96xf32>
      %57 = math.tanh %51 : vector<2x96xf32>
      %58 = vector.extract_strided_slice %56 {offsets = [0, 0], sizes = [2, 24], strides = [1, 1]} : vector<2x96xf32> to vector<2x24xf32>
      %59 = vector.extract_strided_slice %56 {offsets = [0, 24], sizes = [2, 24], strides = [1, 1]} : vector<2x96xf32> to vector<2x24xf32>
      %60 = vector.extract_strided_slice %57 {offsets = [0, 48], sizes = [2, 24], strides = [1, 1]} : vector<2x96xf32> to vector<2x24xf32>
      %61 = vector.extract_strided_slice %56 {offsets = [0, 72], sizes = [2, 24], strides = [1, 1]} : vector<2x96xf32> to vector<2x24xf32>
      %62 = arith.mulf %59, %arg9 : vector<2x24xf32>
      %63 = arith.mulf %58, %60 : vector<2x24xf32>
      %64 = arith.addf %62, %63 : vector<2x24xf32>
      %65 = math.tanh %64 : vector<2x24xf32>
      %66 = arith.mulf %61, %65 : vector<2x24xf32>
      %67 = vector.extract_strided_slice %66 {offsets = [0, 12], sizes = [2, 12], strides = [1, 1]} : vector<2x24xf32> to vector<2x12xf32>
      %c1_i32_23 = arith.constant 1 : i32
      %68 = arith.addi %41, %c1_i32_23 : i32
      %c1_i32_24 = arith.constant 1 : i32
      %69 = arith.addi %68, %c1_i32_24 : i32
      %70 = arith.index_cast %69 : i32 to index
      %c0_25 = arith.constant 0 : index
      %c0_26 = arith.constant 0 : index
      %71 = vector.load %arg0[%70, %c0_25, %c0_26] : memref<73x2x3xf32, #tpu.memory_space<vmem>>, vector<1x2x3xf32>
      %72 = vector.shape_cast %71 : vector<1x2x3xf32> to vector<2x3xf32>
      %cst_27 = arith.constant dense<0.000000e+00> : vector<2x96xf32>
      %73 = tpu.matmul %72, %0, %cst_27 {dimension_numbers = #tpu.dot_dimension_numbers<[1], [0], [0], [1], [0, 0, 1, 1], [], []>} : vector<2x3xf32>, vector<3x96xf32>, vector<2x96xf32> -> vector<2x96xf32>
      %74 = vector.broadcast %1 : vector<1x96xf32> to vector<2x96xf32>
      %75 = arith.addf %73, %74 : vector<2x96xf32>
      %cst_28 = arith.constant dense<0.000000e+00> : vector<2x96xf32>
      %76 = tpu.matmul %66, %2, %cst_28 {dimension_numbers = #tpu.dot_dimension_numbers<[1], [0], [0], [1], [0, 0, 1, 1], [], []>} : vector<2x24xf32>, vector<24x96xf32>, vector<2x96xf32> -> vector<2x96xf32>
      %77 = arith.addf %75, %76 : vector<2x96xf32>
      %78 = arith.negf %77 : vector<2x96xf32>
      %79 = math.exp %78 : vector<2x96xf32>
      %cst_29 = arith.constant 1.000000e+00 : f32
      %80 = vector.broadcast %cst_29 : f32 to vector<2x96xf32>
      %81 = arith.addf %80, %79 : vector<2x96xf32>
      %82 = arith.divf %80, %81 : vector<2x96xf32>
      %83 = math.tanh %77 : vector<2x96xf32>
      %84 = vector.extract_strided_slice %82 {offsets = [0, 0], sizes = [2, 24], strides = [1, 1]} : vector<2x96xf32> to vector<2x24xf32>
      %85 = vector.extract_strided_slice %82 {offsets = [0, 24], sizes = [2, 24], strides = [1, 1]} : vector<2x96xf32> to vector<2x24xf32>
      %86 = vector.extract_strided_slice %83 {offsets = [0, 48], sizes = [2, 24], strides = [1, 1]} : vector<2x96xf32> to vector<2x24xf32>
      %87 = vector.extract_strided_slice %82 {offsets = [0, 72], sizes = [2, 24], strides = [1, 1]} : vector<2x96xf32> to vector<2x24xf32>
      %88 = arith.mulf %85, %64 : vector<2x24xf32>
      %89 = arith.mulf %84, %86 : vector<2x24xf32>
      %90 = arith.addf %88, %89 : vector<2x24xf32>
      %91 = math.tanh %90 : vector<2x24xf32>
      %92 = arith.mulf %87, %91 : vector<2x24xf32>
      %93 = vector.extract_strided_slice %92 {offsets = [0, 12], sizes = [2, 12], strides = [1, 1]} : vector<2x24xf32> to vector<2x12xf32>
      %c2_i32 = arith.constant 2 : i32
      %94 = arith.addi %41, %c2_i32 : i32
      %c1_i32_30 = arith.constant 1 : i32
      %95 = arith.addi %94, %c1_i32_30 : i32
      %96 = arith.index_cast %95 : i32 to index
      %c0_31 = arith.constant 0 : index
      %c0_32 = arith.constant 0 : index
      %97 = vector.load %arg0[%96, %c0_31, %c0_32] : memref<73x2x3xf32, #tpu.memory_space<vmem>>, vector<1x2x3xf32>
      %98 = vector.shape_cast %97 : vector<1x2x3xf32> to vector<2x3xf32>
      %cst_33 = arith.constant dense<0.000000e+00> : vector<2x96xf32>
      %99 = tpu.matmul %98, %0, %cst_33 {dimension_numbers = #tpu.dot_dimension_numbers<[1], [0], [0], [1], [0, 0, 1, 1], [], []>} : vector<2x3xf32>, vector<3x96xf32>, vector<2x96xf32> -> vector<2x96xf32>
      %100 = vector.broadcast %1 : vector<1x96xf32> to vector<2x96xf32>
      %101 = arith.addf %99, %100 : vector<2x96xf32>
      %cst_34 = arith.constant dense<0.000000e+00> : vector<2x96xf32>
      %102 = tpu.matmul %92, %2, %cst_34 {dimension_numbers = #tpu.dot_dimension_numbers<[1], [0], [0], [1], [0, 0, 1, 1], [], []>} : vector<2x24xf32>, vector<24x96xf32>, vector<2x96xf32> -> vector<2x96xf32>
      %103 = arith.addf %101, %102 : vector<2x96xf32>
      %104 = arith.negf %103 : vector<2x96xf32>
      %105 = math.exp %104 : vector<2x96xf32>
      %cst_35 = arith.constant 1.000000e+00 : f32
      %106 = vector.broadcast %cst_35 : f32 to vector<2x96xf32>
      %107 = arith.addf %106, %105 : vector<2x96xf32>
      %108 = arith.divf %106, %107 : vector<2x96xf32>
      %109 = math.tanh %103 : vector<2x96xf32>
      %110 = vector.extract_strided_slice %108 {offsets = [0, 0], sizes = [2, 24], strides = [1, 1]} : vector<2x96xf32> to vector<2x24xf32>
      %111 = vector.extract_strided_slice %108 {offsets = [0, 24], sizes = [2, 24], strides = [1, 1]} : vector<2x96xf32> to vector<2x24xf32>
      %112 = vector.extract_strided_slice %109 {offsets = [0, 48], sizes = [2, 24], strides = [1, 1]} : vector<2x96xf32> to vector<2x24xf32>
      %113 = vector.extract_strided_slice %108 {offsets = [0, 72], sizes = [2, 24], strides = [1, 1]} : vector<2x96xf32> to vector<2x24xf32>
      %114 = arith.mulf %111, %90 : vector<2x24xf32>
      %115 = arith.mulf %110, %112 : vector<2x24xf32>
      %116 = arith.addf %114, %115 : vector<2x24xf32>
      %117 = math.tanh %116 : vector<2x24xf32>
      %118 = arith.mulf %113, %117 : vector<2x24xf32>
      %119 = vector.extract_strided_slice %118 {offsets = [0, 12], sizes = [2, 12], strides = [1, 1]} : vector<2x24xf32> to vector<2x12xf32>
      %c3_i32 = arith.constant 3 : i32
      %120 = arith.addi %41, %c3_i32 : i32
      %c1_i32_36 = arith.constant 1 : i32
      %121 = arith.addi %120, %c1_i32_36 : i32
      %122 = arith.index_cast %121 : i32 to index
      %c0_37 = arith.constant 0 : index
      %c0_38 = arith.constant 0 : index
      %123 = vector.load %arg0[%122, %c0_37, %c0_38] : memref<73x2x3xf32, #tpu.memory_space<vmem>>, vector<1x2x3xf32>
      %124 = vector.shape_cast %123 : vector<1x2x3xf32> to vector<2x3xf32>
      %cst_39 = arith.constant dense<0.000000e+00> : vector<2x96xf32>
      %125 = tpu.matmul %124, %0, %cst_39 {dimension_numbers = #tpu.dot_dimension_numbers<[1], [0], [0], [1], [0, 0, 1, 1], [], []>} : vector<2x3xf32>, vector<3x96xf32>, vector<2x96xf32> -> vector<2x96xf32>
      %126 = vector.broadcast %1 : vector<1x96xf32> to vector<2x96xf32>
      %127 = arith.addf %125, %126 : vector<2x96xf32>
      %cst_40 = arith.constant dense<0.000000e+00> : vector<2x96xf32>
      %128 = tpu.matmul %118, %2, %cst_40 {dimension_numbers = #tpu.dot_dimension_numbers<[1], [0], [0], [1], [0, 0, 1, 1], [], []>} : vector<2x24xf32>, vector<24x96xf32>, vector<2x96xf32> -> vector<2x96xf32>
      %129 = arith.addf %127, %128 : vector<2x96xf32>
      %130 = arith.negf %129 : vector<2x96xf32>
      %131 = math.exp %130 : vector<2x96xf32>
      %cst_41 = arith.constant 1.000000e+00 : f32
      %132 = vector.broadcast %cst_41 : f32 to vector<2x96xf32>
      %133 = arith.addf %132, %131 : vector<2x96xf32>
      %134 = arith.divf %132, %133 : vector<2x96xf32>
      %135 = math.tanh %129 : vector<2x96xf32>
      %136 = vector.extract_strided_slice %134 {offsets = [0, 0], sizes = [2, 24], strides = [1, 1]} : vector<2x96xf32> to vector<2x24xf32>
      %137 = vector.extract_strided_slice %134 {offsets = [0, 24], sizes = [2, 24], strides = [1, 1]} : vector<2x96xf32> to vector<2x24xf32>
      %138 = vector.extract_strided_slice %135 {offsets = [0, 48], sizes = [2, 24], strides = [1, 1]} : vector<2x96xf32> to vector<2x24xf32>
      %139 = vector.extract_strided_slice %134 {offsets = [0, 72], sizes = [2, 24], strides = [1, 1]} : vector<2x96xf32> to vector<2x24xf32>
      %140 = arith.mulf %137, %116 : vector<2x24xf32>
      %141 = arith.mulf %136, %138 : vector<2x24xf32>
      %142 = arith.addf %140, %141 : vector<2x24xf32>
      %143 = math.tanh %142 : vector<2x24xf32>
      %144 = arith.mulf %139, %143 : vector<2x24xf32>
      %145 = vector.extract_strided_slice %144 {offsets = [0, 12], sizes = [2, 12], strides = [1, 1]} : vector<2x24xf32> to vector<2x12xf32>
      %c4_i32 = arith.constant 4 : i32
      %146 = arith.addi %41, %c4_i32 : i32
      %c1_i32_42 = arith.constant 1 : i32
      %147 = arith.addi %146, %c1_i32_42 : i32
      %148 = arith.index_cast %147 : i32 to index
      %c0_43 = arith.constant 0 : index
      %c0_44 = arith.constant 0 : index
      %149 = vector.load %arg0[%148, %c0_43, %c0_44] : memref<73x2x3xf32, #tpu.memory_space<vmem>>, vector<1x2x3xf32>
      %150 = vector.shape_cast %149 : vector<1x2x3xf32> to vector<2x3xf32>
      %cst_45 = arith.constant dense<0.000000e+00> : vector<2x96xf32>
      %151 = tpu.matmul %150, %0, %cst_45 {dimension_numbers = #tpu.dot_dimension_numbers<[1], [0], [0], [1], [0, 0, 1, 1], [], []>} : vector<2x3xf32>, vector<3x96xf32>, vector<2x96xf32> -> vector<2x96xf32>
      %152 = vector.broadcast %1 : vector<1x96xf32> to vector<2x96xf32>
      %153 = arith.addf %151, %152 : vector<2x96xf32>
      %cst_46 = arith.constant dense<0.000000e+00> : vector<2x96xf32>
      %154 = tpu.matmul %144, %2, %cst_46 {dimension_numbers = #tpu.dot_dimension_numbers<[1], [0], [0], [1], [0, 0, 1, 1], [], []>} : vector<2x24xf32>, vector<24x96xf32>, vector<2x96xf32> -> vector<2x96xf32>
      %155 = arith.addf %153, %154 : vector<2x96xf32>
      %156 = arith.negf %155 : vector<2x96xf32>
      %157 = math.exp %156 : vector<2x96xf32>
      %cst_47 = arith.constant 1.000000e+00 : f32
      %158 = vector.broadcast %cst_47 : f32 to vector<2x96xf32>
      %159 = arith.addf %158, %157 : vector<2x96xf32>
      %160 = arith.divf %158, %159 : vector<2x96xf32>
      %161 = math.tanh %155 : vector<2x96xf32>
      %162 = vector.extract_strided_slice %160 {offsets = [0, 0], sizes = [2, 24], strides = [1, 1]} : vector<2x96xf32> to vector<2x24xf32>
      %163 = vector.extract_strided_slice %160 {offsets = [0, 24], sizes = [2, 24], strides = [1, 1]} : vector<2x96xf32> to vector<2x24xf32>
      %164 = vector.extract_strided_slice %161 {offsets = [0, 48], sizes = [2, 24], strides = [1, 1]} : vector<2x96xf32> to vector<2x24xf32>
      %165 = vector.extract_strided_slice %160 {offsets = [0, 72], sizes = [2, 24], strides = [1, 1]} : vector<2x96xf32> to vector<2x24xf32>
      %166 = arith.mulf %163, %142 : vector<2x24xf32>
      %167 = arith.mulf %162, %164 : vector<2x24xf32>
      %168 = arith.addf %166, %167 : vector<2x24xf32>
      %169 = math.tanh %168 : vector<2x24xf32>
      %170 = arith.mulf %165, %169 : vector<2x24xf32>
      %171 = vector.extract_strided_slice %170 {offsets = [0, 12], sizes = [2, 12], strides = [1, 1]} : vector<2x24xf32> to vector<2x12xf32>
      %c5_i32 = arith.constant 5 : i32
      %172 = arith.addi %41, %c5_i32 : i32
      %c1_i32_48 = arith.constant 1 : i32
      %173 = arith.addi %172, %c1_i32_48 : i32
      %174 = arith.index_cast %173 : i32 to index
      %c0_49 = arith.constant 0 : index
      %c0_50 = arith.constant 0 : index
      %175 = vector.load %arg0[%174, %c0_49, %c0_50] : memref<73x2x3xf32, #tpu.memory_space<vmem>>, vector<1x2x3xf32>
      %176 = vector.shape_cast %175 : vector<1x2x3xf32> to vector<2x3xf32>
      %cst_51 = arith.constant dense<0.000000e+00> : vector<2x96xf32>
      %177 = tpu.matmul %176, %0, %cst_51 {dimension_numbers = #tpu.dot_dimension_numbers<[1], [0], [0], [1], [0, 0, 1, 1], [], []>} : vector<2x3xf32>, vector<3x96xf32>, vector<2x96xf32> -> vector<2x96xf32>
      %178 = vector.broadcast %1 : vector<1x96xf32> to vector<2x96xf32>
      %179 = arith.addf %177, %178 : vector<2x96xf32>
      %cst_52 = arith.constant dense<0.000000e+00> : vector<2x96xf32>
      %180 = tpu.matmul %170, %2, %cst_52 {dimension_numbers = #tpu.dot_dimension_numbers<[1], [0], [0], [1], [0, 0, 1, 1], [], []>} : vector<2x24xf32>, vector<24x96xf32>, vector<2x96xf32> -> vector<2x96xf32>
      %181 = arith.addf %179, %180 : vector<2x96xf32>
      %182 = arith.negf %181 : vector<2x96xf32>
      %183 = math.exp %182 : vector<2x96xf32>
      %cst_53 = arith.constant 1.000000e+00 : f32
      %184 = vector.broadcast %cst_53 : f32 to vector<2x96xf32>
      %185 = arith.addf %184, %183 : vector<2x96xf32>
      %186 = arith.divf %184, %185 : vector<2x96xf32>
      %187 = math.tanh %181 : vector<2x96xf32>
      %188 = vector.extract_strided_slice %186 {offsets = [0, 0], sizes = [2, 24], strides = [1, 1]} : vector<2x96xf32> to vector<2x24xf32>
      %189 = vector.extract_strided_slice %186 {offsets = [0, 24], sizes = [2, 24], strides = [1, 1]} : vector<2x96xf32> to vector<2x24xf32>
      %190 = vector.extract_strided_slice %187 {offsets = [0, 48], sizes = [2, 24], strides = [1, 1]} : vector<2x96xf32> to vector<2x24xf32>
      %191 = vector.extract_strided_slice %186 {offsets = [0, 72], sizes = [2, 24], strides = [1, 1]} : vector<2x96xf32> to vector<2x24xf32>
      %192 = arith.mulf %189, %168 : vector<2x24xf32>
      %193 = arith.mulf %188, %190 : vector<2x24xf32>
      %194 = arith.addf %192, %193 : vector<2x24xf32>
      %195 = math.tanh %194 : vector<2x24xf32>
      %196 = arith.mulf %191, %195 : vector<2x24xf32>
      %197 = vector.extract_strided_slice %196 {offsets = [0, 12], sizes = [2, 12], strides = [1, 1]} : vector<2x24xf32> to vector<2x12xf32>
      %c6_i32 = arith.constant 6 : i32
      %198 = arith.addi %41, %c6_i32 : i32
      %c1_i32_54 = arith.constant 1 : i32
      %199 = arith.addi %198, %c1_i32_54 : i32
      %200 = arith.index_cast %199 : i32 to index
      %c0_55 = arith.constant 0 : index
      %c0_56 = arith.constant 0 : index
      %201 = vector.load %arg0[%200, %c0_55, %c0_56] : memref<73x2x3xf32, #tpu.memory_space<vmem>>, vector<1x2x3xf32>
      %202 = vector.shape_cast %201 : vector<1x2x3xf32> to vector<2x3xf32>
      %cst_57 = arith.constant dense<0.000000e+00> : vector<2x96xf32>
      %203 = tpu.matmul %202, %0, %cst_57 {dimension_numbers = #tpu.dot_dimension_numbers<[1], [0], [0], [1], [0, 0, 1, 1], [], []>} : vector<2x3xf32>, vector<3x96xf32>, vector<2x96xf32> -> vector<2x96xf32>
      %204 = vector.broadcast %1 : vector<1x96xf32> to vector<2x96xf32>
      %205 = arith.addf %203, %204 : vector<2x96xf32>
      %cst_58 = arith.constant dense<0.000000e+00> : vector<2x96xf32>
      %206 = tpu.matmul %196, %2, %cst_58 {dimension_numbers = #tpu.dot_dimension_numbers<[1], [0], [0], [1], [0, 0, 1, 1], [], []>} : vector<2x24xf32>, vector<24x96xf32>, vector<2x96xf32> -> vector<2x96xf32>
      %207 = arith.addf %205, %206 : vector<2x96xf32>
      %208 = arith.negf %207 : vector<2x96xf32>
      %209 = math.exp %208 : vector<2x96xf32>
      %cst_59 = arith.constant 1.000000e+00 : f32
      %210 = vector.broadcast %cst_59 : f32 to vector<2x96xf32>
      %211 = arith.addf %210, %209 : vector<2x96xf32>
      %212 = arith.divf %210, %211 : vector<2x96xf32>
      %213 = math.tanh %207 : vector<2x96xf32>
      %214 = vector.extract_strided_slice %212 {offsets = [0, 0], sizes = [2, 24], strides = [1, 1]} : vector<2x96xf32> to vector<2x24xf32>
      %215 = vector.extract_strided_slice %212 {offsets = [0, 24], sizes = [2, 24], strides = [1, 1]} : vector<2x96xf32> to vector<2x24xf32>
      %216 = vector.extract_strided_slice %213 {offsets = [0, 48], sizes = [2, 24], strides = [1, 1]} : vector<2x96xf32> to vector<2x24xf32>
      %217 = vector.extract_strided_slice %212 {offsets = [0, 72], sizes = [2, 24], strides = [1, 1]} : vector<2x96xf32> to vector<2x24xf32>
      %218 = arith.mulf %215, %194 : vector<2x24xf32>
      %219 = arith.mulf %214, %216 : vector<2x24xf32>
      %220 = arith.addf %218, %219 : vector<2x24xf32>
      %221 = math.tanh %220 : vector<2x24xf32>
      %222 = arith.mulf %217, %221 : vector<2x24xf32>
      %223 = vector.extract_strided_slice %222 {offsets = [0, 12], sizes = [2, 12], strides = [1, 1]} : vector<2x24xf32> to vector<2x12xf32>
      %c7_i32 = arith.constant 7 : i32
      %224 = arith.addi %41, %c7_i32 : i32
      %c1_i32_60 = arith.constant 1 : i32
      %225 = arith.addi %224, %c1_i32_60 : i32
      %226 = arith.index_cast %225 : i32 to index
      %c0_61 = arith.constant 0 : index
      %c0_62 = arith.constant 0 : index
      %227 = vector.load %arg0[%226, %c0_61, %c0_62] : memref<73x2x3xf32, #tpu.memory_space<vmem>>, vector<1x2x3xf32>
      %228 = vector.shape_cast %227 : vector<1x2x3xf32> to vector<2x3xf32>
      %cst_63 = arith.constant dense<0.000000e+00> : vector<2x96xf32>
      %229 = tpu.matmul %228, %0, %cst_63 {dimension_numbers = #tpu.dot_dimension_numbers<[1], [0], [0], [1], [0, 0, 1, 1], [], []>} : vector<2x3xf32>, vector<3x96xf32>, vector<2x96xf32> -> vector<2x96xf32>
      %230 = vector.broadcast %1 : vector<1x96xf32> to vector<2x96xf32>
      %231 = arith.addf %229, %230 : vector<2x96xf32>
      %cst_64 = arith.constant dense<0.000000e+00> : vector<2x96xf32>
      %232 = tpu.matmul %222, %2, %cst_64 {dimension_numbers = #tpu.dot_dimension_numbers<[1], [0], [0], [1], [0, 0, 1, 1], [], []>} : vector<2x24xf32>, vector<24x96xf32>, vector<2x96xf32> -> vector<2x96xf32>
      %233 = arith.addf %231, %232 : vector<2x96xf32>
      %234 = arith.negf %233 : vector<2x96xf32>
      %235 = math.exp %234 : vector<2x96xf32>
      %cst_65 = arith.constant 1.000000e+00 : f32
      %236 = vector.broadcast %cst_65 : f32 to vector<2x96xf32>
      %237 = arith.addf %236, %235 : vector<2x96xf32>
      %238 = arith.divf %236, %237 : vector<2x96xf32>
      %239 = math.tanh %233 : vector<2x96xf32>
      %240 = vector.extract_strided_slice %238 {offsets = [0, 0], sizes = [2, 24], strides = [1, 1]} : vector<2x96xf32> to vector<2x24xf32>
      %241 = vector.extract_strided_slice %238 {offsets = [0, 24], sizes = [2, 24], strides = [1, 1]} : vector<2x96xf32> to vector<2x24xf32>
      %242 = vector.extract_strided_slice %239 {offsets = [0, 48], sizes = [2, 24], strides = [1, 1]} : vector<2x96xf32> to vector<2x24xf32>
      %243 = vector.extract_strided_slice %238 {offsets = [0, 72], sizes = [2, 24], strides = [1, 1]} : vector<2x96xf32> to vector<2x24xf32>
      %244 = arith.mulf %241, %220 : vector<2x24xf32>
      %245 = arith.mulf %240, %242 : vector<2x24xf32>
      %246 = arith.addf %244, %245 : vector<2x24xf32>
      %247 = math.tanh %246 : vector<2x24xf32>
      %248 = arith.mulf %243, %247 : vector<2x24xf32>
      %249 = vector.extract_strided_slice %248 {offsets = [0, 12], sizes = [2, 12], strides = [1, 1]} : vector<2x24xf32> to vector<2x12xf32>
      %250 = tpu.concatenate %67, %93, %119, %145, %171, %197, %223, %249 in 1 : vector<2x12xf32>, vector<2x12xf32>, vector<2x12xf32>, vector<2x12xf32>, vector<2x12xf32>, vector<2x12xf32>, vector<2x12xf32>, vector<2x12xf32> -> vector<2x96xf32>
      %251 = arith.negf %250 : vector<2x96xf32>
      %252 = math.exp %251 : vector<2x96xf32>
      %cst_66 = arith.constant 1.000000e+00 : f32
      %253 = vector.broadcast %cst_66 : f32 to vector<2x96xf32>
      %254 = arith.addf %253, %252 : vector<2x96xf32>
      %255 = arith.divf %253, %254 : vector<2x96xf32>
      %256 = arith.index_cast %arg7 : i32 to index
      %c0_67 = arith.constant 0 : index
      %c0_68 = arith.constant 0 : index
      %257 = vector.load %arg4[%256, %c0_67, %c0_68] : memref<9x96x216xf32, #tpu.memory_space<vmem>>, vector<1x96x216xf32>
      %258 = vector.shape_cast %257 : vector<1x96x216xf32> to vector<96x216xf32>
      %cst_69 = arith.constant dense<0.000000e+00> : vector<2x216xf32>
      %259 = tpu.matmul %255, %258, %cst_69 {dimension_numbers = #tpu.dot_dimension_numbers<[1], [0], [0], [1], [0, 0, 1, 1], [], []>} : vector<2x96xf32>, vector<96x216xf32>, vector<2x216xf32> -> vector<2x216xf32>
      %260 = arith.addf %arg10, %259 : vector<2x216xf32>
      scf.yield %248, %246, %260 : vector<2x24xf32>, vector<2x24xf32>, vector<2x216xf32>
    }
    %c9_i32_11 = arith.constant 9 : i32
    %c0_12 = arith.constant 0 : index
    %c0_13 = arith.constant 0 : index
    %36 = vector.load %arg5[%c0_12, %c0_13] : memref<1x216xf32, #tpu.memory_space<vmem>>, vector<1x216xf32>
    %37 = vector.broadcast %36 : vector<1x216xf32> to vector<2x216xf32>
    %38 = arith.addf %35#2, %37 : vector<2x216xf32>
    %c0_14 = arith.constant 0 : index
    %c0_15 = arith.constant 0 : index
    %39 = vector.load %arg6[%c0_14, %c0_15] : memref<2x216xf32, #tpu.memory_space<vmem>>, vector<2x216xf32>
    tpu.vector_store %arg6[%c0_14, %c0_15], %38 {strides = array<i32>} : memref<2x216xf32, #tpu.memory_space<vmem>>, vector<2x216xf32>,
    return
  }
}

</mosaic_0001>

<llo_original>
// kernel: net_forward.1
$region0: #{net_forward.1}
  #allocation0 [shape = 'u32[]', space=smem, size = 0x4, offset = 0x4, fixed_abs, tag = 'smem constant byte address 0x4 - core index']
  #allocation1 [shape = 'u32[144,128]{1,0:T(1,128)}', space=vmem, size = 0x12000, scoped, tag = 'internal scratch']
  %s0 = inlined_call_operand.vmem [shape: f32[73,2,3], index: 0, kind: input, shape index: {}]
  %s1 = inlined_call_operand.vmem [shape: f32[3,96], index: 1, kind: input, shape index: {}]
  %s2 = inlined_call_operand.vmem [shape: f32[1,96], index: 2, kind: input, shape index: {}]
  %s3 = inlined_call_operand.vmem [shape: f32[24,96], index: 3, kind: input, shape index: {}]
  %s4 = inlined_call_operand.hbm [shape: f32[9,96,216], index: 4, kind: input, shape index: {}]
  %s5 = inlined_call_operand.vmem [shape: f32[1,216], index: 5, kind: input, shape index: {}]
  %s6 = inlined_call_operand.hbm [shape: f32[2,216], index: 6, kind: output, shape index: {}]
  %s7 = sld [smem:[#allocation0]]
  $region45: #{net_forward.1} parent=0
    _
  %s9 = ssub.s32 1, %s7
  %s10 = scalar_select 0, %s9, %s7
  $region1: #{net_forward.1} parent=0
    #allocation2 [shape = 'u8[884736]{0}', space=vmem, size = 0xd8000, scoped, tag = 'input window, operand 4, single buffered']
    #allocation3 [shape = 's32[1]{0}', space=sflag, size = 0x4, scoped, tag = 'scoped memory for net_forward.1']
    #allocation4 [shape = 's32[1]{0}', space=sflag, size = 0x4, scoped, tag = 'scoped memory for net_forward.1']
    #allocation5 [shape = 'u8[2048]{0}', space=vmem, size = 0x800, scoped, tag = 'output window, operand 0, single buffered']
    %11 = vsyncpa [#allocation3], 0
    %12 = vsyncpa [#allocation4], 0
    // Predicated region
    $region2: #{net_forward.1} parent=1 // pred_check
      _
    $region3: #{net_forward.1} parent=1 // pred_check_branch
      %14 = sbr.rel (0) target = $region5
    $region4: #{net_forward.1} parent=1 // pred_region
      _
    $region5: #{net_forward.1} parent=1 // pred_fallthru
      _
    // Predicated region
    $region6: #{net_forward.1} parent=1 // pred_check
      _
    $region7: #{net_forward.1} parent=1 // pred_check_branch
      %16 = sbr.rel (0) target = $region9
    $region8: #{net_forward.1} parent=1 // pred_region
      _
    $region9: #{net_forward.1} parent=1 // pred_fallthru
      _
    // Predicated region
    $region10: #{net_forward.1} parent=1 // pred_check
      _
    $region11: #{net_forward.1} parent=1 // pred_check_branch
      %18 = sbr.rel (0) target = $region13
    $region12: #{net_forward.1} parent=1 // pred_region
      _
    $region13: #{net_forward.1} parent=1 // pred_fallthru
      _
    // Predicated region
    $region14: #{net_forward.1} parent=1 // pred_check
      _
    $region15: #{net_forward.1} parent=1 // pred_check_branch
      %20 = sbr.rel (0) target = $region17
    $region16: #{net_forward.1} parent=1 // pred_region
      _
    $region17: #{net_forward.1} parent=1 // pred_fallthru
      _
    // Predicated region
    $region18: #{net_forward.1} parent=1 // pred_check
      _
    $region19: #{net_forward.1} parent=1 // pred_check_branch
      %22 = sbr.rel (0) target = $region21
    $region20: #{net_forward.1} parent=1 // pred_region
      %s24 = ssub.s32 27648, 27648
      %25 = vsyncadd [#allocation3], %s24
      %s26 = sshll.u32 [#allocation2], 4
      %s27 = int_to_ptr.vmem [resolvable:$true] %s26
      %32 = dma.hbm_to_vmem [thread:$0]  %s4, 27648, %s27, [#allocation3], 256, 256, 16
    $region21: #{net_forward.1} parent=1 // pred_fallthru
      _
    // Predicated region
    $region22: #{net_forward.1} parent=1 // pred_check
      _
    $region23: #{net_forward.1} parent=1 // pred_check_branch
      %34 = sbr.rel (0) target = $region25
    $region24: #{net_forward.1} parent=1 // pred_region
      _
    $region25: #{net_forward.1} parent=1 // pred_fallthru
      _
    // Predicated region
    $region26: #{net_forward.1} parent=1 // pred_check
      _
    $region27: #{net_forward.1} parent=1 // pred_check_branch
      %36 = sbr.rel (0) target = $region29
    $region28: #{net_forward.1} parent=1 // pred_region
      %37 = dma.done [#allocation3], 27648
    $region29: #{net_forward.1} parent=1 // pred_fallthru
      _
    %v38 = vld [vmem:[%s1] sm:$0x7]
    %v39 = vld [vmem:[%s2] sm:$0x1]
    %v40 = vld [vmem:[%s3] sm:$0xff]
    %v41 = vld [vmem:[%s3 + $0x8] sm:$0xff]
    %v42 = vld [vmem:[%s3 + $0x10] sm:$0xff]
    %v43 = vlaneseq
    %v44 = vand.u32 %v43, 127
    %vm45 = vcmp.lt.s32.totalorder %v44, 12
    %v46 = vsel %vm45, 1, 0
    %v47 = vcvt.s32.f32 %v46
    %v48 = vld [vmem:[%s0] sm:$0x3]
    %v50 = vlaneseq
    %v51 = vshrl.u32 %v50, 7
    %v52 = vsub.s32 0, %v51
    %v53 = vrot.slane %v39, %v52
    %vm55 = vcmask 23552
    %v57 = vsel %vm55, %v48, 0
    %vm59 = vcmask 1042432
    %v61 = vsel %vm59, %v38, 0
    %63 = vmatprep.subr.mxu0 0.0
    %64 = vmatpush1.msra.mxu0 %v61
    %65 = vmatprep.subr.mxu0 0.0
    %66 = vmatpush1.msra.mxu0 0.0
    %67 = vmatprep.subr.mxu0 0.0
    %68 = vmatpush1.msra.mxu0 0.0
    %69 = vmatprep.subr.mxu0 0.0
    %70 = vmatpush1.msra.mxu0 0.0
    %71 = vmatprep.subr.mxu0 0.0
    %72 = vmatpush1.msra.mxu0 0.0
    %73 = vmatprep.subr.mxu0 0.0
    %74 = vmatpush1.msra.mxu0 0.0
    %75 = vmatprep.subr.mxu0 0.0
    %76 = vmatpush1.msra.mxu0 0.0
    %77 = vmatprep.subr.mxu0 0.0
    %78 = vmatpush1.msra.mxu0 0.0
    %79 = vmatprep.subr.mxu0 0.0
    %80 = vmatpush1.msra.mxu0 0.0
    %81 = vmatprep.subr.mxu0 0.0
    %82 = vmatpush1.msra.mxu0 0.0
    %83 = vmatprep.subr.mxu0 0.0
    %84 = vmatpush1.msra.mxu0 0.0
    %85 = vmatprep.subr.mxu0 0.0
    %86 = vmatpush1.msra.mxu0 0.0
    %87 = vmatprep.subr.mxu0 0.0
    %88 = vmatpush1.msra.mxu0 0.0
    %89 = vmatprep.subr.mxu0 0.0
    %90 = vmatpush1.msra.mxu0 0.0
    %91 = vmatprep.subr.mxu0 0.0
    %92 = vmatpush1.msra.mxu0 0.0
    %93 = vmatprep.subr.mxu0 0.0
    %94 = vmatpush1.msra.mxu0 0.0
    %95 = vmatprep.subr.mxu0 0.0
    %96 = vmatpush1.msra.mxu0 0.0
    %97 = vmatprep.subr.mxu0 0.0
    %98 = vmatpush1.msra.mxu0 0.0
    %99 = vmatprep.subr.mxu0 0.0
    %100 = vmatpush1.msra.mxu0 0.0
    %101 = vmatprep.subr.mxu0 0.0
    %102 = vmatpush1.msra.mxu0 0.0
    %103 = vmatprep.subr.mxu0 0.0
    %104 = vmatpush1.msra.mxu0 0.0
    %105 = vmatprep.subr.mxu0 0.0
    %106 = vmatpush1.msra.mxu0 0.0
    %107 = vmatprep.subr.mxu0 0.0
    %108 = vmatpush1.msra.mxu0 0.0
    %109 = vmatprep.subr.mxu0 0.0
    %110 = vmatpush1.msra.mxu0 0.0
    %111 = vmatprep.subr.mxu0 0.0
    %112 = vmatpush1.msra.mxu0 0.0
    %113 = vmatprep.subr.mxu0 0.0
    %114 = vmatpush1.msra.mxu0 0.0
    %115 = vmatprep.subr.mxu0 0.0
    %116 = vmatpush1.msra.mxu0 0.0
    %117 = vmatprep.subr.mxu0 0.0
    %118 = vmatpush1.msra.mxu0 0.0
    %119 = vmatprep.subr.mxu0 0.0
    %120 = vmatpush1.msra.mxu0 0.0
    %121 = vmatprep.subr.mxu0 0.0
    %122 = vmatpush1.msra.mxu0 0.0
    %123 = vmatprep.subr.mxu0 0.0
    %124 = vmatpush1.msra.mxu0 0.0
    %125 = vmatprep.subr.mxu0 0.0
    %126 = vmatpush1.msra.mxu0 0.0
    %127 = vmatprep.mubr.f32.mxu0 0.0
    %128 = vmatmul.mubr.f32.gmra.mrb[0].mxu0 %v57
    %v129 = vpop.f32.mrb[0].mxu0
    %v130 = vadd.f32 %v53, %v129
    %v131 = vpop.f32.mrb[0].mxu0
    %132 = vdwg.mxu0
    %v133 = vxor.u32 %v130, 2147483648
    %v134 = vmul.f32 %v133, 1.442695
    %v135 = vpow.pop %v134
    %v136 = vadd.f32 %v135, 1.0
    %v137 = vrcp.pop %v136
    %v138 = vmul.f32 1.0, %v137
    %v139 = vtanh.pop %v130
    %v140 = vmul.f32 %v138, 0.0
    %142 = vrot.lane.b32.xlu0 %v139, 80
    %v143 = vpop.permute.xlu0 %142
    %v145 = vmul.f32 %v138, %v143
    %147 = vrot.lane.b32.xlu0 %v145, 24
    %v148 = vpop.permute.xlu0 %147
    %v150 = vadd.f32 %v140, %v148
    %v151 = vtanh.pop %v150
    %153 = vrot.lane.b32.xlu0 %v151, 48
    %v154 = vpop.permute.xlu0 %153
    %v156 = vmul.f32 %v138, %v154
    %158 = vrot.lane.b32.xlu0 %v47, 72
    %v159 = vpop.permute.xlu0 %158
    %v161 = vmul.f32 %v156, %v159
    %162 = vrot.lane.b32.xlu0 %v47, 24
    %v163 = vpop.permute.xlu0 %162
    %v165 = vmul.f32 %v150, %v163
    loop: start=0, step=1, limit=9
    $region30: #{net_forward.1} parent=1 // loop_pre_header
      _
    $region31: #{net_forward.1} parent=1 // loop_header
      %s167 = sphi 0, %s171
      %p168 = scmp.ge.s32.totalorder %s167, 9
      %v172 = vphi %v161, %v1593
      %v173 = vphi %v165, %v1587
      %v174 = vphi 0.0, %v1734
      %v175 = vphi 0.0, %v1735
    $region32: #{net_forward.1} parent=1 // loop_header_branch
      %170 = sbr.rel (%p168) target = $region36
    $region33: #{net_forward.1} parent=1 // loop_body
      %s176 = smul.u32 %s167, 8
      %s177 = sadd.s32 %s176, 1
      %s178 = smul.u32 %s177, 2
      %s179 = scalar_lea.vmem %s0, %s178
      %v180 = vld [vmem:[%s179] sm:$0x3]
      %v182 = vsel %vm55, %v180, 0
      %184 = vmatprep.subr.mxu0 0.0
      %185 = vmatpush1.msra.mxu0 %v61
      %186 = vmatprep.subr.mxu0 0.0
      %187 = vmatpush1.msra.mxu0 0.0
      %188 = vmatprep.subr.mxu0 0.0
      %189 = vmatpush1.msra.mxu0 0.0
      %190 = vmatprep.subr.mxu0 0.0
      %191 = vmatpush1.msra.mxu0 0.0
      %192 = vmatprep.subr.mxu0 0.0
      %193 = vmatpush1.msra.mxu0 0.0
      %194 = vmatprep.subr.mxu0 0.0
      %195 = vmatpush1.msra.mxu0 0.0
      %196 = vmatprep.subr.mxu0 0.0
      %197 = vmatpush1.msra.mxu0 0.0
      %198 = vmatprep.subr.mxu0 0.0
      %199 = vmatpush1.msra.mxu0 0.0
      %200 = vmatprep.subr.mxu0 0.0
      %201 = vmatpush1.msra.mxu0 0.0
      %202 = vmatprep.subr.mxu0 0.0
      %203 = vmatpush1.msra.mxu0 0.0
      %204 = vmatprep.subr.mxu0 0.0
      %205 = vmatpush1.msra.mxu0 0.0
      %206 = vmatprep.subr.mxu0 0.0
      %207 = vmatpush1.msra.mxu0 0.0
      %208 = vmatprep.subr.mxu0 0.0
      %209 = vmatpush1.msra.mxu0 0.0
      %210 = vmatprep.subr.mxu0 0.0
      %211 = vmatpush1.msra.mxu0 0.0
      %212 = vmatprep.subr.mxu0 0.0
      %213 = vmatpush1.msra.mxu0 0.0
      %214 = vmatprep.subr.mxu0 0.0
      %215 = vmatpush1.msra.mxu0 0.0
      %216 = vmatprep.subr.mxu0 0.0
      %217 = vmatpush1.msra.mxu0 0.0
      %218 = vmatprep.subr.mxu0 0.0
      %219 = vmatpush1.msra.mxu0 0.0
      %220 = vmatprep.subr.mxu0 0.0
      %221 = vmatpush1.msra.mxu0 0.0
      %222 = vmatprep.subr.mxu0 0.0
      %223 = vmatpush1.msra.mxu0 0.0
      %224 = vmatprep.subr.mxu0 0.0
      %225 = vmatpush1.msra.mxu0 0.0
      %226 = vmatprep.subr.mxu0 0.0
      %227 = vmatpush1.msra.mxu0 0.0
      %228 = vmatprep.subr.mxu0 0.0
      %229 = vmatpush1.msra.mxu0 0.0
      %230 = vmatprep.subr.mxu0 0.0
      %231 = vmatpush1.msra.mxu0 0.0
      %232 = vmatprep.subr.mxu0 0.0
      %233 = vmatpush1.msra.mxu0 0.0
      %234 = vmatprep.subr.mxu0 0.0
      %235 = vmatpush1.msra.mxu0 0.0
      %236 = vmatprep.subr.mxu0 0.0
      %237 = vmatpush1.msra.mxu0 0.0
      %238 = vmatprep.subr.mxu0 0.0
      %239 = vmatpush1.msra.mxu0 0.0
      %240 = vmatprep.subr.mxu0 0.0
      %241 = vmatpush1.msra.mxu0 0.0
      %242 = vmatprep.subr.mxu0 0.0
      %243 = vmatpush1.msra.mxu0 0.0
      %244 = vmatprep.subr.mxu0 0.0
      %245 = vmatpush1.msra.mxu0 0.0
      %246 = vmatprep.subr.mxu0 0.0
      %247 = vmatpush1.msra.mxu0 0.0
      %248 = vmatprep.mubr.f32.mxu0 0.0
      %249 = vmatmul.mubr.f32.gmra.mrb[0].mxu0 %v182
      %v250 = vpop.f32.mrb[0].mxu0
      %v251 = vadd.f32 %v53, %v250
      %v252 = vpop.f32.mrb[0].mxu0
      %253 = vdwg.mxu0
      %255 = vrot.lane.b32.xlu0 %v172, 56
      %v256 = vpop.permute.xlu0 %255
      %vm257 = vcmask 195584
      %v258 = vsel %vm257, %v256, 0
      %260 = vmatprep.subr.mxu0 0.0
      %261 = vmatpush1.msra.mxu0 %v40
      %262 = vmatprep.subr.mxu0 0.0
      %263 = vmatpush1.msra.mxu0 %v41
      %264 = vmatprep.subr.mxu0 0.0
      %265 = vmatpush1.msra.mxu0 %v42
      %266 = vmatprep.subr.mxu0 0.0
      %267 = vmatpush1.msra.mxu0 0.0
      %268 = vmatprep.subr.mxu0 0.0
      %269 = vmatpush1.msra.mxu0 0.0
      %270 = vmatprep.subr.mxu0 0.0
      %271 = vmatpush1.msra.mxu0 0.0
      %272 = vmatprep.subr.mxu0 0.0
      %273 = vmatpush1.msra.mxu0 0.0
      %274 = vmatprep.subr.mxu0 0.0
      %275 = vmatpush1.msra.mxu0 0.0
      %276 = vmatprep.subr.mxu0 0.0
      %277 = vmatpush1.msra.mxu0 0.0
      %278 = vmatprep.subr.mxu0 0.0
      %279 = vmatpush1.msra.mxu0 0.0
      %280 = vmatprep.subr.mxu0 0.0
      %281 = vmatpush1.msra.mxu0 0.0
      %282 = vmatprep.subr.mxu0 0.0
      %283 = vmatpush1.msra.mxu0 0.0
      %284 = vmatprep.subr.mxu0 0.0
      %285 = vmatpush1.msra.mxu0 0.0
      %286 = vmatprep.subr.mxu0 0.0
      %287 = vmatpush1.msra.mxu0 0.0
      %288 = vmatprep.subr.mxu0 0.0
      %289 = vmatpush1.msra.mxu0 0.0
      %290 = vmatprep.subr.mxu0 0.0
      %291 = vmatpush1.msra.mxu0 0.0
      %292 = vmatprep.subr.mxu0 0.0
      %293 = vmatpush1.msra.mxu0 0.0
      %294 = vmatprep.subr.mxu0 0.0
      %295 = vmatpush1.msra.mxu0 0.0
      %296 = vmatprep.subr.mxu0 0.0
      %297 = vmatpush1.msra.mxu0 0.0
      %298 = vmatprep.subr.mxu0 0.0
      %299 = vmatpush1.msra.mxu0 0.0
      %300 = vmatprep.subr.mxu0 0.0
      %301 = vmatpush1.msra.mxu0 0.0
      %302 = vmatprep.subr.mxu0 0.0
      %303 = vmatpush1.msra.mxu0 0.0
      %304 = vmatprep.subr.mxu0 0.0
      %305 = vmatpush1.msra.mxu0 0.0
      %306 = vmatprep.subr.mxu0 0.0
      %307 = vmatpush1.msra.mxu0 0.0
      %308 = vmatprep.subr.mxu0 0.0
      %309 = vmatpush1.msra.mxu0 0.0
      %310 = vmatprep.subr.mxu0 0.0
      %311 = vmatpush1.msra.mxu0 0.0
      %312 = vmatprep.subr.mxu0 0.0
      %313 = vmatpush1.msra.mxu0 0.0
      %314 = vmatprep.subr.mxu0 0.0
      %315 = vmatpush1.msra.mxu0 0.0
      %316 = vmatprep.subr.mxu0 0.0
      %317 = vmatpush1.msra.mxu0 0.0
      %318 = vmatprep.subr.mxu0 0.0
      %319 = vmatpush1.msra.mxu0 0.0
      %320 = vmatprep.subr.mxu0 0.0
      %321 = vmatpush1.msra.mxu0 0.0
      %322 = vmatprep.subr.mxu0 0.0
      %323 = vmatpush1.msra.mxu0 0.0
      %324 = vmatprep.mubr.f32.mxu0 0.0
      %325 = vmatmul.mubr.f32.gmra.mrb[0].mxu0 %v258
      %v326 = vpop.f32.mrb[0].mxu0
      %v327 = vadd.f32 0.0, %v326
      %v328 = vpop.f32.mrb[0].mxu0
      %329 = vdwg.mxu0
      %v330 = vadd.f32 %v251, %v327
      %v331 = vxor.u32 %v330, 2147483648
      %v332 = vmul.f32 %v331, 1.442695
      %v333 = vpow.pop %v332
      %v334 = vadd.f32 %v333, 1.0
      %v335 = vrcp.pop %v334
      %v336 = vmul.f32 1.0, %v335
      %v337 = vtanh.pop %v330
      %v338 = vmul.f32 %v336, %v173
      %340 = vrot.lane.b32.xlu0 %v337, 80
      %v341 = vpop.permute.xlu0 %340
      %v343 = vmul.f32 %v336, %v341
      %345 = vrot.lane.b32.xlu0 %v343, 24
      %v346 = vpop.permute.xlu0 %345
      %v348 = vadd.f32 %v338, %v346
      %v349 = vtanh.pop %v348
      %351 = vrot.lane.b32.xlu0 %v349, 48
      %v352 = vpop.permute.xlu0 %351
      %v354 = vmul.f32 %v336, %v352
      %s355 = sadd.s32 %s176, 2
      %s356 = smul.u32 %s355, 2
      %s357 = scalar_lea.vmem %s0, %s356
      %v358 = vld [vmem:[%s357] sm:$0x3]
      %v360 = vsel %vm55, %v358, 0
      %362 = vmatprep.subr.mxu0 0.0
      %363 = vmatpush1.msra.mxu0 %v61
      %364 = vmatprep.subr.mxu0 0.0
      %365 = vmatpush1.msra.mxu0 0.0
      %366 = vmatprep.subr.mxu0 0.0
      %367 = vmatpush1.msra.mxu0 0.0
      %368 = vmatprep.subr.mxu0 0.0
      %369 = vmatpush1.msra.mxu0 0.0
      %370 = vmatprep.subr.mxu0 0.0
      %371 = vmatpush1.msra.mxu0 0.0
      %372 = vmatprep.subr.mxu0 0.0
      %373 = vmatpush1.msra.mxu0 0.0
      %374 = vmatprep.subr.mxu0 0.0
      %375 = vmatpush1.msra.mxu0 0.0
      %376 = vmatprep.subr.mxu0 0.0
      %377 = vmatpush1.msra.mxu0 0.0
      %378 = vmatprep.subr.mxu0 0.0
      %379 = vmatpush1.msra.mxu0 0.0
      %380 = vmatprep.subr.mxu0 0.0
      %381 = vmatpush1.msra.mxu0 0.0
      %382 = vmatprep.subr.mxu0 0.0
      %383 = vmatpush1.msra.mxu0 0.0
      %384 = vmatprep.subr.mxu0 0.0
      %385 = vmatpush1.msra.mxu0 0.0
      %386 = vmatprep.subr.mxu0 0.0
      %387 = vmatpush1.msra.mxu0 0.0
      %388 = vmatprep.subr.mxu0 0.0
      %389 = vmatpush1.msra.mxu0 0.0
      %390 = vmatprep.subr.mxu0 0.0
      %391 = vmatpush1.msra.mxu0 0.0
      %392 = vmatprep.subr.mxu0 0.0
      %393 = vmatpush1.msra.mxu0 0.0
      %394 = vmatprep.subr.mxu0 0.0
      %395 = vmatpush1.msra.mxu0 0.0
      %396 = vmatprep.subr.mxu0 0.0
      %397 = vmatpush1.msra.mxu0 0.0
      %398 = vmatprep.subr.mxu0 0.0
      %399 = vmatpush1.msra.mxu0 0.0
      %400 = vmatprep.subr.mxu0 0.0
      %401 = vmatpush1.msra.mxu0 0.0
      %402 = vmatprep.subr.mxu0 0.0
      %403 = vmatpush1.msra.mxu0 0.0
      %404 = vmatprep.subr.mxu0 0.0
      %405 = vmatpush1.msra.mxu0 0.0
      %406 = vmatprep.subr.mxu0 0.0
      %407 = vmatpush1.msra.mxu0 0.0
      %408 = vmatprep.subr.mxu0 0.0
      %409 = vmatpush1.msra.mxu0 0.0
      %410 = vmatprep.subr.mxu0 0.0
      %411 = vmatpush1.msra.mxu0 0.0
      %412 = vmatprep.subr.mxu0 0.0
      %413 = vmatpush1.msra.mxu0 0.0
      %414 = vmatprep.subr.mxu0 0.0
      %415 = vmatpush1.msra.mxu0 0.0
      %416 = vmatprep.subr.mxu0 0.0
      %417 = vmatpush1.msra.mxu0 0.0
      %418 = vmatprep.subr.mxu0 0.0
      %419 = vmatpush1.msra.mxu0 0.0
      %420 = vmatprep.subr.mxu0 0.0
      %421 = vmatpush1.msra.mxu0 0.0
      %422 = vmatprep.subr.mxu0 0.0
      %423 = vmatpush1.msra.mxu0 0.0
      %424 = vmatprep.subr.mxu0 0.0
      %425 = vmatpush1.msra.mxu0 0.0
      %426 = vmatprep.mubr.f32.mxu0 0.0
      %427 = vmatmul.mubr.f32.gmra.mrb[0].mxu0 %v360
      %v428 = vpop.f32.mrb[0].mxu0
      %v429 = vadd.f32 %v53, %v428
      %v430 = vpop.f32.mrb[0].mxu0
      %431 = vdwg.mxu0
      %433 = vrot.lane.b32.xlu0 %v354, 56
      %v434 = vpop.permute.xlu0 %433
      %v435 = vsel %vm257, %v434, 0
      %437 = vmatprep.subr.mxu0 0.0
      %438 = vmatpush1.msra.mxu0 %v40
      %439 = vmatprep.subr.mxu0 0.0
      %440 = vmatpush1.msra.mxu0 %v41
      %441 = vmatprep.subr.mxu0 0.0
      %442 = vmatpush1.msra.mxu0 %v42
      %443 = vmatprep.subr.mxu0 0.0
      %444 = vmatpush1.msra.mxu0 0.0
      %445 = vmatprep.subr.mxu0 0.0
      %446 = vmatpush1.msra.mxu0 0.0
      %447 = vmatprep.subr.mxu0 0.0
      %448 = vmatpush1.msra.mxu0 0.0
      %449 = vmatprep.subr.mxu0 0.0
      %450 = vmatpush1.msra.mxu0 0.0
      %451 = vmatprep.subr.mxu0 0.0
      %452 = vmatpush1.msra.mxu0 0.0
      %453 = vmatprep.subr.mxu0 0.0
      %454 = vmatpush1.msra.mxu0 0.0
      %455 = vmatprep.subr.mxu0 0.0
      %456 = vmatpush1.msra.mxu0 0.0
      %457 = vmatprep.subr.mxu0 0.0
      %458 = vmatpush1.msra.mxu0 0.0
      %459 = vmatprep.subr.mxu0 0.0
      %460 = vmatpush1.msra.mxu0 0.0
      %461 = vmatprep.subr.mxu0 0.0
      %462 = vmatpush1.msra.mxu0 0.0
      %463 = vmatprep.subr.mxu0 0.0
      %464 = vmatpush1.msra.mxu0 0.0
      %465 = vmatprep.subr.mxu0 0.0
      %466 = vmatpush1.msra.mxu0 0.0
      %467 = vmatprep.subr.mxu0 0.0
      %468 = vmatpush1.msra.mxu0 0.0
      %469 = vmatprep.subr.mxu0 0.0
      %470 = vmatpush1.msra.mxu0 0.0
      %471 = vmatprep.subr.mxu0 0.0
      %472 = vmatpush1.msra.mxu0 0.0
      %473 = vmatprep.subr.mxu0 0.0
      %474 = vmatpush1.msra.mxu0 0.0
      %475 = vmatprep.subr.mxu0 0.0
      %476 = vmatpush1.msra.mxu0 0.0
      %477 = vmatprep.subr.mxu0 0.0
      %478 = vmatpush1.msra.mxu0 0.0
      %479 = vmatprep.subr.mxu0 0.0
      %480 = vmatpush1.msra.mxu0 0.0
      %481 = vmatprep.subr.mxu0 0.0
      %482 = vmatpush1.msra.mxu0 0.0
      %483 = vmatprep.subr.mxu0 0.0
      %484 = vmatpush1.msra.mxu0 0.0
      %485 = vmatprep.subr.mxu0 0.0
      %486 = vmatpush1.msra.mxu0 0.0
      %487 = vmatprep.subr.mxu0 0.0
      %488 = vmatpush1.msra.mxu0 0.0
      %489 = vmatprep.subr.mxu0 0.0
      %490 = vmatpush1.msra.mxu0 0.0
      %491 = vmatprep.subr.mxu0 0.0
      %492 = vmatpush1.msra.mxu0 0.0
      %493 = vmatprep.subr.mxu0 0.0
      %494 = vmatpush1.msra.mxu0 0.0
      %495 = vmatprep.subr.mxu0 0.0
      %496 = vmatpush1.msra.mxu0 0.0
      %497 = vmatprep.subr.mxu0 0.0
      %498 = vmatpush1.msra.mxu0 0.0
      %499 = vmatprep.subr.mxu0 0.0
      %500 = vmatpush1.msra.mxu0 0.0
      %501 = vmatprep.mubr.f32.mxu0 0.0
      %502 = vmatmul.mubr.f32.gmra.mrb[0].mxu0 %v435
      %v503 = vpop.f32.mrb[0].mxu0
      %v504 = vadd.f32 0.0, %v503
      %v505 = vpop.f32.mrb[0].mxu0
      %506 = vdwg.mxu0
      %v507 = vadd.f32 %v429, %v504
      %v508 = vxor.u32 %v507, 2147483648
      %v509 = vmul.f32 %v508, 1.442695
      %v510 = vpow.pop %v509
      %v511 = vadd.f32 %v510, 1.0
      %v512 = vrcp.pop %v511
      %v513 = vmul.f32 1.0, %v512
      %v514 = vtanh.pop %v507
      %v515 = vmul.f32 %v513, %v348
      %517 = vrot.lane.b32.xlu0 %v514, 80
      %v518 = vpop.permute.xlu0 %517
      %v520 = vmul.f32 %v513, %v518
      %522 = vrot.lane.b32.xlu0 %v520, 24
      %v523 = vpop.permute.xlu0 %522
      %v525 = vadd.f32 %v515, %v523
      %v526 = vtanh.pop %v525
      %528 = vrot.lane.b32.xlu0 %v526, 48
      %v529 = vpop.permute.xlu0 %528
      %v531 = vmul.f32 %v513, %v529
      %s532 = sadd.s32 %s176, 3
      %s533 = smul.u32 %s532, 2
      %s534 = scalar_lea.vmem %s0, %s533
      %v535 = vld [vmem:[%s534] sm:$0x3]
      %v537 = vsel %vm55, %v535, 0
      %539 = vmatprep.subr.mxu0 0.0
      %540 = vmatpush1.msra.mxu0 %v61
      %541 = vmatprep.subr.mxu0 0.0
      %542 = vmatpush1.msra.mxu0 0.0
      %543 = vmatprep.subr.mxu0 0.0
      %544 = vmatpush1.msra.mxu0 0.0
      %545 = vmatprep.subr.mxu0 0.0
      %546 = vmatpush1.msra.mxu0 0.0
      %547 = vmatprep.subr.mxu0 0.0
      %548 = vmatpush1.msra.mxu0 0.0
      %549 = vmatprep.subr.mxu0 0.0
      %550 = vmatpush1.msra.mxu0 0.0
      %551 = vmatprep.subr.mxu0 0.0
      %552 = vmatpush1.msra.mxu0 0.0
      %553 = vmatprep.subr.mxu0 0.0
      %554 = vmatpush1.msra.mxu0 0.0
      %555 = vmatprep.subr.mxu0 0.0
      %556 = vmatpush1.msra.mxu0 0.0
      %557 = vmatprep.subr.mxu0 0.0
      %558 = vmatpush1.msra.mxu0 0.0
      %559 = vmatprep.subr.mxu0 0.0
      %560 = vmatpush1.msra.mxu0 0.0
      %561 = vmatprep.subr.mxu0 0.0
      %562 = vmatpush1.msra.mxu0 0.0
      %563 = vmatprep.subr.mxu0 0.0
      %564 = vmatpush1.msra.mxu0 0.0
      %565 = vmatprep.subr.mxu0 0.0
      %566 = vmatpush1.msra.mxu0 0.0
      %567 = vmatprep.subr.mxu0 0.0
      %568 = vmatpush1.msra.mxu0 0.0
      %569 = vmatprep.subr.mxu0 0.0
      %570 = vmatpush1.msra.mxu0 0.0
      %571 = vmatprep.subr.mxu0 0.0
      %572 = vmatpush1.msra.mxu0 0.0
      %573 = vmatprep.subr.mxu0 0.0
      %574 = vmatpush1.msra.mxu0 0.0
      %575 = vmatprep.subr.mxu0 0.0
      %576 = vmatpush1.msra.mxu0 0.0
      %577 = vmatprep.subr.mxu0 0.0
      %578 = vmatpush1.msra.mxu0 0.0
      %579 = vmatprep.subr.mxu0 0.0
      %580 = vmatpush1.msra.mxu0 0.0
      %581 = vmatprep.subr.mxu0 0.0
      %582 = vmatpush1.msra.mxu0 0.0
      %583 = vmatprep.subr.mxu0 0.0
      %584 = vmatpush1.msra.mxu0 0.0
      %585 = vmatprep.subr.mxu0 0.0
      %586 = vmatpush1.msra.mxu0 0.0
      %587 = vmatprep.subr.mxu0 0.0
      %588 = vmatpush1.msra.mxu0 0.0
      %589 = vmatprep.subr.mxu0 0.0
      %590 = vmatpush1.msra.mxu0 0.0
      %591 = vmatprep.subr.mxu0 0.0
      %592 = vmatpush1.msra.mxu0 0.0
      %593 = vmatprep.subr.mxu0 0.0
      %594 = vmatpush1.msra.mxu0 0.0
      %595 = vmatprep.subr.mxu0 0.0
      %596 = vmatpush1.msra.mxu0 0.0
      %597 = vmatprep.subr.mxu0 0.0
      %598 = vmatpush1.msra.mxu0 0.0
      %599 = vmatprep.subr.mxu0 0.0
      %600 = vmatpush1.msra.mxu0 0.0
      %601 = vmatprep.subr.mxu0 0.0
      %602 = vmatpush1.msra.mxu0 0.0
      %603 = vmatprep.mubr.f32.mxu0 0.0
      %604 = vmatmul.mubr.f32.gmra.mrb[0].mxu0 %v537
      %v605 = vpop.f32.mrb[0].mxu0
      %v606 = vadd.f32 %v53, %v605
      %v607 = vpop.f32.mrb[0].mxu0
      %608 = vdwg.mxu0
      %610 = vrot.lane.b32.xlu0 %v531, 56
      %v611 = vpop.permute.xlu0 %610
      %v612 = vsel %vm257, %v611, 0
      %614 = vmatprep.subr.mxu0 0.0
      %615 = vmatpush1.msra.mxu0 %v40
      %616 = vmatprep.subr.mxu0 0.0
      %617 = vmatpush1.msra.mxu0 %v41
      %618 = vmatprep.subr.mxu0 0.0
      %619 = vmatpush1.msra.mxu0 %v42
      %620 = vmatprep.subr.mxu0 0.0
      %621 = vmatpush1.msra.mxu0 0.0
      %622 = vmatprep.subr.mxu0 0.0
      %623 = vmatpush1.msra.mxu0 0.0
      %624 = vmatprep.subr.mxu0 0.0
      %625 = vmatpush1.msra.mxu0 0.0
      %626 = vmatprep.subr.mxu0 0.0
      %627 = vmatpush1.msra.mxu0 0.0
      %628 = vmatprep.subr.mxu0 0.0
      %629 = vmatpush1.msra.mxu0 0.0
      %630 = vmatprep.subr.mxu0 0.0
      %631 = vmatpush1.msra.mxu0 0.0
      %632 = vmatprep.subr.mxu0 0.0
      %633 = vmatpush1.msra.mxu0 0.0
      %634 = vmatprep.subr.mxu0 0.0
      %635 = vmatpush1.msra.mxu0 0.0
      %636 = vmatprep.subr.mxu0 0.0
      %637 = vmatpush1.msra.mxu0 0.0
      %638 = vmatprep.subr.mxu0 0.0
      %639 = vmatpush1.msra.mxu0 0.0
      %640 = vmatprep.subr.mxu0 0.0
      %641 = vmatpush1.msra.mxu0 0.0
      %642 = vmatprep.subr.mxu0 0.0
      %643 = vmatpush1.msra.mxu0 0.0
      %644 = vmatprep.subr.mxu0 0.0
      %645 = vmatpush1.msra.mxu0 0.0
      %646 = vmatprep.subr.mxu0 0.0
      %647 = vmatpush1.msra.mxu0 0.0
      %648 = vmatprep.subr.mxu0 0.0
      %649 = vmatpush1.msra.mxu0 0.0
      %650 = vmatprep.subr.mxu0 0.0
      %651 = vmatpush1.msra.mxu0 0.0
      %652 = vmatprep.subr.mxu0 0.0
      %653 = vmatpush1.msra.mxu0 0.0
      %654 = vmatprep.subr.mxu0 0.0
      %655 = vmatpush1.msra.mxu0 0.0
      %656 = vmatprep.subr.mxu0 0.0
      %657 = vmatpush1.msra.mxu0 0.0
      %658 = vmatprep.subr.mxu0 0.0
      %659 = vmatpush1.msra.mxu0 0.0
      %660 = vmatprep.subr.mxu0 0.0
      %661 = vmatpush1.msra.mxu0 0.0
      %662 = vmatprep.subr.mxu0 0.0
      %663 = vmatpush1.msra.mxu0 0.0
      %664 = vmatprep.subr.mxu0 0.0
      %665 = vmatpush1.msra.mxu0 0.0
      %666 = vmatprep.subr.mxu0 0.0
      %667 = vmatpush1.msra.mxu0 0.0
      %668 = vmatprep.subr.mxu0 0.0
      %669 = vmatpush1.msra.mxu0 0.0
      %670 = vmatprep.subr.mxu0 0.0
      %671 = vmatpush1.msra.mxu0 0.0
      %672 = vmatprep.subr.mxu0 0.0
      %673 = vmatpush1.msra.mxu0 0.0
      %674 = vmatprep.subr.mxu0 0.0
      %675 = vmatpush1.msra.mxu0 0.0
      %676 = vmatprep.subr.mxu0 0.0
      %677 = vmatpush1.msra.mxu0 0.0
      %678 = vmatprep.mubr.f32.mxu0 0.0
      %679 = vmatmul.mubr.f32.gmra.mrb[0].mxu0 %v612
      %v680 = vpop.f32.mrb[0].mxu0
      %v681 = vadd.f32 0.0, %v680
      %v682 = vpop.f32.mrb[0].mxu0
      %683 = vdwg.mxu0
      %v684 = vadd.f32 %v606, %v681
      %v685 = vxor.u32 %v684, 2147483648
      %v686 = vmul.f32 %v685, 1.442695
      %v687 = vpow.pop %v686
      %v688 = vadd.f32 %v687, 1.0
      %v689 = vrcp.pop %v688
      %v690 = vmul.f32 1.0, %v689
      %v691 = vtanh.pop %v684
      %v692 = vmul.f32 %v690, %v525
      %694 = vrot.lane.b32.xlu0 %v691, 80
      %v695 = vpop.permute.xlu0 %694
      %v697 = vmul.f32 %v690, %v695
      %699 = vrot.lane.b32.xlu0 %v697, 24
      %v700 = vpop.permute.xlu0 %699
      %v702 = vadd.f32 %v692, %v700
      %v703 = vtanh.pop %v702
      %705 = vrot.lane.b32.xlu0 %v703, 48
      %v706 = vpop.permute.xlu0 %705
      %v708 = vmul.f32 %v690, %v706
      %s709 = sadd.s32 %s176, 4
      %s710 = smul.u32 %s709, 2
      %s711 = scalar_lea.vmem %s0, %s710
      %v712 = vld [vmem:[%s711] sm:$0x3]
      %v714 = vsel %vm55, %v712, 0
      %716 = vmatprep.subr.mxu0 0.0
      %717 = vmatpush1.msra.mxu0 %v61
      %718 = vmatprep.subr.mxu0 0.0
      %719 = vmatpush1.msra.mxu0 0.0
      %720 = vmatprep.subr.mxu0 0.0
      %721 = vmatpush1.msra.mxu0 0.0
      %722 = vmatprep.subr.mxu0 0.0
      %723 = vmatpush1.msra.mxu0 0.0
      %724 = vmatprep.subr.mxu0 0.0
      %725 = vmatpush1.msra.mxu0 0.0
      %726 = vmatprep.subr.mxu0 0.0
      %727 = vmatpush1.msra.mxu0 0.0
      %728 = vmatprep.subr.mxu0 0.0
      %729 = vmatpush1.msra.mxu0 0.0
      %730 = vmatprep.subr.mxu0 0.0
      %731 = vmatpush1.msra.mxu0 0.0
      %732 = vmatprep.subr.mxu0 0.0
      %733 = vmatpush1.msra.mxu0 0.0
      %734 = vmatprep.subr.mxu0 0.0
      %735 = vmatpush1.msra.mxu0 0.0
      %736 = vmatprep.subr.mxu0 0.0
      %737 = vmatpush1.msra.mxu0 0.0
      %738 = vmatprep.subr.mxu0 0.0
      %739 = vmatpush1.msra.mxu0 0.0
      %740 = vmatprep.subr.mxu0 0.0
      %741 = vmatpush1.msra.mxu0 0.0
      %742 = vmatprep.subr.mxu0 0.0
      %743 = vmatpush1.msra.mxu0 0.0
      %744 = vmatprep.subr.mxu0 0.0
      %745 = vmatpush1.msra.mxu0 0.0
      %746 = vmatprep.subr.mxu0 0.0
      %747 = vmatpush1.msra.mxu0 0.0
      %748 = vmatprep.subr.mxu0 0.0
      %749 = vmatpush1.msra.mxu0 0.0
      %750 = vmatprep.subr.mxu0 0.0
      %751 = vmatpush1.msra.mxu0 0.0
      %752 = vmatprep.subr.mxu0 0.0
      %753 = vmatpush1.msra.mxu0 0.0
      %754 = vmatprep.subr.mxu0 0.0
      %755 = vmatpush1.msra.mxu0 0.0
      %756 = vmatprep.subr.mxu0 0.0
      %757 = vmatpush1.msra.mxu0 0.0
      %758 = vmatprep.subr.mxu0 0.0
      %759 = vmatpush1.msra.mxu0 0.0
      %760 = vmatprep.subr.mxu0 0.0
      %761 = vmatpush1.msra.mxu0 0.0
      %762 = vmatprep.subr.mxu0 0.0
      %763 = vmatpush1.msra.mxu0 0.0
      %764 = vmatprep.subr.mxu0 0.0
      %765 = vmatpush1.msra.mxu0 0.0
      %766 = vmatprep.subr.mxu0 0.0
      %767 = vmatpush1.msra.mxu0 0.0
      %768 = vmatprep.subr.mxu0 0.0
      %769 = vmatpush1.msra.mxu0 0.0
      %770 = vmatprep.subr.mxu0 0.0
      %771 = vmatpush1.msra.mxu0 0.0
      %772 = vmatprep.subr.mxu0 0.0
      %773 = vmatpush1.msra.mxu0 0.0
      %774 = vmatprep.subr.mxu0 0.0
      %775 = vmatpush1.msra.mxu0 0.0
      %776 = vmatprep.subr.mxu0 0.0
      %777 = vmatpush1.msra.mxu0 0.0
      %778 = vmatprep.subr.mxu0 0.0
      %779 = vmatpush1.msra.mxu0 0.0
      %780 = vmatprep.mubr.f32.mxu0 0.0
      %781 = vmatmul.mubr.f32.gmra.mrb[0].mxu0 %v714
      %v782 = vpop.f32.mrb[0].mxu0
      %v783 = vadd.f32 %v53, %v782
      %v784 = vpop.f32.mrb[0].mxu0
      %785 = vdwg.mxu0
      %787 = vrot.lane.b32.xlu0 %v708, 56
      %v788 = vpop.permute.xlu0 %787
      %v789 = vsel %vm257, %v788, 0
      %791 = vmatprep.subr.mxu0 0.0
      %792 = vmatpush1.msra.mxu0 %v40
      %793 = vmatprep.subr.mxu0 0.0
      %794 = vmatpush1.msra.mxu0 %v41
      %795 = vmatprep.subr.mxu0 0.0
      %796 = vmatpush1.msra.mxu0 %v42
      %797 = vmatprep.subr.mxu0 0.0
      %798 = vmatpush1.msra.mxu0 0.0
      %799 = vmatprep.subr.mxu0 0.0
      %800 = vmatpush1.msra.mxu0 0.0
      %801 = vmatprep.subr.mxu0 0.0
      %802 = vmatpush1.msra.mxu0 0.0
      %803 = vmatprep.subr.mxu0 0.0
      %804 = vmatpush1.msra.mxu0 0.0
      %805 = vmatprep.subr.mxu0 0.0
      %806 = vmatpush1.msra.mxu0 0.0
      %807 = vmatprep.subr.mxu0 0.0
      %808 = vmatpush1.msra.mxu0 0.0
      %809 = vmatprep.subr.mxu0 0.0
      %810 = vmatpush1.msra.mxu0 0.0
      %811 = vmatprep.subr.mxu0 0.0
      %812 = vmatpush1.msra.mxu0 0.0
      %813 = vmatprep.subr.mxu0 0.0
      %814 = vmatpush1.msra.mxu0 0.0
      %815 = vmatprep.subr.mxu0 0.0
      %816 = vmatpush1.msra.mxu0 0.0
      %817 = vmatprep.subr.mxu0 0.0
      %818 = vmatpush1.msra.mxu0 0.0
      %819 = vmatprep.subr.mxu0 0.0
      %820 = vmatpush1.msra.mxu0 0.0
      %821 = vmatprep.subr.mxu0 0.0
      %822 = vmatpush1.msra.mxu0 0.0
      %823 = vmatprep.subr.mxu0 0.0
      %824 = vmatpush1.msra.mxu0 0.0
      %825 = vmatprep.subr.mxu0 0.0
      %826 = vmatpush1.msra.mxu0 0.0
      %827 = vmatprep.subr.mxu0 0.0
      %828 = vmatpush1.msra.mxu0 0.0
      %829 = vmatprep.subr.mxu0 0.0
      %830 = vmatpush1.msra.mxu0 0.0
      %831 = vmatprep.subr.mxu0 0.0
      %832 = vmatpush1.msra.mxu0 0.0
      %833 = vmatprep.subr.mxu0 0.0
      %834 = vmatpush1.msra.mxu0 0.0
      %835 = vmatprep.subr.mxu0 0.0
      %836 = vmatpush1.msra.mxu0 0.0
      %837 = vmatprep.subr.mxu0 0.0
      %838 = vmatpush1.msra.mxu0 0.0
      %839 = vmatprep.subr.mxu0 0.0
      %840 = vmatpush1.msra.mxu0 0.0
      %841 = vmatprep.subr.mxu0 0.0
      %842 = vmatpush1.msra.mxu0 0.0
      %843 = vmatprep.subr.mxu0 0.0
      %844 = vmatpush1.msra.mxu0 0.0
      %845 = vmatprep.subr.mxu0 0.0
      %846 = vmatpush1.msra.mxu0 0.0
      %847 = vmatprep.subr.mxu0 0.0
      %848 = vmatpush1.msra.mxu0 0.0
      %849 = vmatprep.subr.mxu0 0.0
      %850 = vmatpush1.msra.mxu0 0.0
      %851 = vmatprep.subr.mxu0 0.0
      %852 = vmatpush1.msra.mxu0 0.0
      %853 = vmatprep.subr.mxu0 0.0
      %854 = vmatpush1.msra.mxu0 0.0
      %855 = vmatprep.mubr.f32.mxu0 0.0
      %856 = vmatmul.mubr.f32.gmra.mrb[0].mxu0 %v789
      %v857 = vpop.f32.mrb[0].mxu0
      %v858 = vadd.f32 0.0, %v857
      %v859 = vpop.f32.mrb[0].mxu0
      %860 = vdwg.mxu0
      %v861 = vadd.f32 %v783, %v858
      %v862 = vxor.u32 %v861, 2147483648
      %v863 = vmul.f32 %v862, 1.442695
      %v864 = vpow.pop %v863
      %v865 = vadd.f32 %v864, 1.0
      %v866 = vrcp.pop %v865
      %v867 = vmul.f32 1.0, %v866
      %v868 = vtanh.pop %v861
      %v869 = vmul.f32 %v867, %v702
      %871 = vrot.lane.b32.xlu0 %v868, 80
      %v872 = vpop.permute.xlu0 %871
      %v874 = vmul.f32 %v867, %v872
      %876 = vrot.lane.b32.xlu0 %v874, 24
      %v877 = vpop.permute.xlu0 %876
      %v879 = vadd.f32 %v869, %v877
      %v880 = vtanh.pop %v879
      %882 = vrot.lane.b32.xlu0 %v880, 48
      %v883 = vpop.permute.xlu0 %882
      %v885 = vmul.f32 %v867, %v883
      %s886 = sadd.s32 %s176, 5
      %s887 = smul.u32 %s886, 2
      %s888 = scalar_lea.vmem %s0, %s887
      %v889 = vld [vmem:[%s888] sm:$0x3]
      %v891 = vsel %vm55, %v889, 0
      %893 = vmatprep.subr.mxu0 0.0
      %894 = vmatpush1.msra.mxu0 %v61
      %895 = vmatprep.subr.mxu0 0.0
      %896 = vmatpush1.msra.mxu0 0.0
      %897 = vmatprep.subr.mxu0 0.0
      %898 = vmatpush1.msra.mxu0 0.0
      %899 = vmatprep.subr.mxu0 0.0
      %900 = vmatpush1.msra.mxu0 0.0
      %901 = vmatprep.subr.mxu0 0.0
      %902 = vmatpush1.msra.mxu0 0.0
      %903 = vmatprep.subr.mxu0 0.0
      %904 = vmatpush1.msra.mxu0 0.0
      %905 = vmatprep.subr.mxu0 0.0
      %906 = vmatpush1.msra.mxu0 0.0
      %907 = vmatprep.subr.mxu0 0.0
      %908 = vmatpush1.msra.mxu0 0.0
      %909 = vmatprep.subr.mxu0 0.0
      %910 = vmatpush1.msra.mxu0 0.0
      %911 = vmatprep.subr.mxu0 0.0
      %912 = vmatpush1.msra.mxu0 0.0
      %913 = vmatprep.subr.mxu0 0.0
      %914 = vmatpush1.msra.mxu0 0.0
      %915 = vmatprep.subr.mxu0 0.0
      %916 = vmatpush1.msra.mxu0 0.0
      %917 = vmatprep.subr.mxu0 0.0
      %918 = vmatpush1.msra.mxu0 0.0
      %919 = vmatprep.subr.mxu0 0.0
      %920 = vmatpush1.msra.mxu0 0.0
      %921 = vmatprep.subr.mxu0 0.0
      %922 = vmatpush1.msra.mxu0 0.0
      %923 = vmatprep.subr.mxu0 0.0
      %924 = vmatpush1.msra.mxu0 0.0
      %925 = vmatprep.subr.mxu0 0.0
      %926 = vmatpush1.msra.mxu0 0.0
      %927 = vmatprep.subr.mxu0 0.0
      %928 = vmatpush1.msra.mxu0 0.0
      %929 = vmatprep.subr.mxu0 0.0
      %930 = vmatpush1.msra.mxu0 0.0
      %931 = vmatprep.subr.mxu0 0.0
      %932 = vmatpush1.msra.mxu0 0.0
      %933 = vmatprep.subr.mxu0 0.0
      %934 = vmatpush1.msra.mxu0 0.0
      %935 = vmatprep.subr.mxu0 0.0
      %936 = vmatpush1.msra.mxu0 0.0
      %937 = vmatprep.subr.mxu0 0.0
      %938 = vmatpush1.msra.mxu0 0.0
      %939 = vmatprep.subr.mxu0 0.0
      %940 = vmatpush1.msra.mxu0 0.0
      %941 = vmatprep.subr.mxu0 0.0
      %942 = vmatpush1.msra.mxu0 0.0
      %943 = vmatprep.subr.mxu0 0.0
      %944 = vmatpush1.msra.mxu0 0.0
      %945 = vmatprep.subr.mxu0 0.0
      %946 = vmatpush1.msra.mxu0 0.0
      %947 = vmatprep.subr.mxu0 0.0
      %948 = vmatpush1.msra.mxu0 0.0
      %949 = vmatprep.subr.mxu0 0.0
      %950 = vmatpush1.msra.mxu0 0.0
      %951 = vmatprep.subr.mxu0 0.0
      %952 = vmatpush1.msra.mxu0 0.0
      %953 = vmatprep.subr.mxu0 0.0
      %954 = vmatpush1.msra.mxu0 0.0
      %955 = vmatprep.subr.mxu0 0.0
      %956 = vmatpush1.msra.mxu0 0.0
      %957 = vmatprep.mubr.f32.mxu0 0.0
      %958 = vmatmul.mubr.f32.gmra.mrb[0].mxu0 %v891
      %v959 = vpop.f32.mrb[0].mxu0
      %v960 = vadd.f32 %v53, %v959
      %v961 = vpop.f32.mrb[0].mxu0
      %962 = vdwg.mxu0
      %964 = vrot.lane.b32.xlu0 %v885, 56
      %v965 = vpop.permute.xlu0 %964
      %v966 = vsel %vm257, %v965, 0
      %968 = vmatprep.subr.mxu0 0.0
      %969 = vmatpush1.msra.mxu0 %v40
      %970 = vmatprep.subr.mxu0 0.0
      %971 = vmatpush1.msra.mxu0 %v41
      %972 = vmatprep.subr.mxu0 0.0
      %973 = vmatpush1.msra.mxu0 %v42
      %974 = vmatprep.subr.mxu0 0.0
      %975 = vmatpush1.msra.mxu0 0.0
      %976 = vmatprep.subr.mxu0 0.0
      %977 = vmatpush1.msra.mxu0 0.0
      %978 = vmatprep.subr.mxu0 0.0
      %979 = vmatpush1.msra.mxu0 0.0
      %980 = vmatprep.subr.mxu0 0.0
      %981 = vmatpush1.msra.mxu0 0.0
      %982 = vmatprep.subr.mxu0 0.0
      %983 = vmatpush1.msra.mxu0 0.0
      %984 = vmatprep.subr.mxu0 0.0
      %985 = vmatpush1.msra.mxu0 0.0
      %986 = vmatprep.subr.mxu0 0.0
      %987 = vmatpush1.msra.mxu0 0.0
      %988 = vmatprep.subr.mxu0 0.0
      %989 = vmatpush1.msra.mxu0 0.0
      %990 = vmatprep.subr.mxu0 0.0
      %991 = vmatpush1.msra.mxu0 0.0
      %992 = vmatprep.subr.mxu0 0.0
      %993 = vmatpush1.msra.mxu0 0.0
      %994 = vmatprep.subr.mxu0 0.0
      %995 = vmatpush1.msra.mxu0 0.0
      %996 = vmatprep.subr.mxu0 0.0
      %997 = vmatpush1.msra.mxu0 0.0
      %998 = vmatprep.subr.mxu0 0.0
      %999 = vmatpush1.msra.mxu0 0.0
      %1000 = vmatprep.subr.mxu0 0.0
      %1001 = vmatpush1.msra.mxu0 0.0
      %1002 = vmatprep.subr.mxu0 0.0
      %1003 = vmatpush1.msra.mxu0 0.0
      %1004 = vmatprep.subr.mxu0 0.0
      %1005 = vmatpush1.msra.mxu0 0.0
      %1006 = vmatprep.subr.mxu0 0.0
      %1007 = vmatpush1.msra.mxu0 0.0
      %1008 = vmatprep.subr.mxu0 0.0
      %1009 = vmatpush1.msra.mxu0 0.0
      %1010 = vmatprep.subr.mxu0 0.0
      %1011 = vmatpush1.msra.mxu0 0.0
      %1012 = vmatprep.subr.mxu0 0.0
      %1013 = vmatpush1.msra.mxu0 0.0
      %1014 = vmatprep.subr.mxu0 0.0
      %1015 = vmatpush1.msra.mxu0 0.0
      %1016 = vmatprep.subr.mxu0 0.0
      %1017 = vmatpush1.msra.mxu0 0.0
      %1018 = vmatprep.subr.mxu0 0.0
      %1019 = vmatpush1.msra.mxu0 0.0
      %1020 = vmatprep.subr.mxu0 0.0
      %1021 = vmatpush1.msra.mxu0 0.0
      %1022 = vmatprep.subr.mxu0 0.0
      %1023 = vmatpush1.msra.mxu0 0.0
      %1024 = vmatprep.subr.mxu0 0.0
      %1025 = vmatpush1.msra.mxu0 0.0
      %1026 = vmatprep.subr.mxu0 0.0
      %1027 = vmatpush1.msra.mxu0 0.0
      %1028 = vmatprep.subr.mxu0 0.0
      %1029 = vmatpush1.msra.mxu0 0.0
      %1030 = vmatprep.subr.mxu0 0.0
      %1031 = vmatpush1.msra.mxu0 0.0
      %1032 = vmatprep.mubr.f32.mxu0 0.0
      %1033 = vmatmul.mubr.f32.gmra.mrb[0].mxu0 %v966
      %v1034 = vpop.f32.mrb[0].mxu0
      %v1035 = vadd.f32 0.0, %v1034
      %v1036 = vpop.f32.mrb[0].mxu0
      %1037 = vdwg.mxu0
      %v1038 = vadd.f32 %v960, %v1035
      %v1039 = vxor.u32 %v1038, 2147483648
      %v1040 = vmul.f32 %v1039, 1.442695
      %v1041 = vpow.pop %v1040
      %v1042 = vadd.f32 %v1041, 1.0
      %v1043 = vrcp.pop %v1042
      %v1044 = vmul.f32 1.0, %v1043
      %v1045 = vtanh.pop %v1038
      %v1046 = vmul.f32 %v1044, %v879
      %1048 = vrot.lane.b32.xlu0 %v1045, 80
      %v1049 = vpop.permute.xlu0 %1048
      %v1051 = vmul.f32 %v1044, %v1049
      %1053 = vrot.lane.b32.xlu0 %v1051, 24
      %v1054 = vpop.permute.xlu0 %1053
      %v1056 = vadd.f32 %v1046, %v1054
      %v1057 = vtanh.pop %v1056
      %1059 = vrot.lane.b32.xlu0 %v1057, 48
      %v1060 = vpop.permute.xlu0 %1059
      %v1062 = vmul.f32 %v1044, %v1060
      %s1063 = sadd.s32 %s176, 6
      %s1064 = smul.u32 %s1063, 2
      %s1065 = scalar_lea.vmem %s0, %s1064
      %v1066 = vld [vmem:[%s1065] sm:$0x3]
      %v1068 = vsel %vm55, %v1066, 0
      %1070 = vmatprep.subr.mxu0 0.0
      %1071 = vmatpush1.msra.mxu0 %v61
      %1072 = vmatprep.subr.mxu0 0.0
      %1073 = vmatpush1.msra.mxu0 0.0
      %1074 = vmatprep.subr.mxu0 0.0
      %1075 = vmatpush1.msra.mxu0 0.0
      %1076 = vmatprep.subr.mxu0 0.0
      %1077 = vmatpush1.msra.mxu0 0.0
      %1078 = vmatprep.subr.mxu0 0.0
      %1079 = vmatpush1.msra.mxu0 0.0
      %1080 = vmatprep.subr.mxu0 0.0
      %1081 = vmatpush1.msra.mxu0 0.0
      %1082 = vmatprep.subr.mxu0 0.0
      %1083 = vmatpush1.msra.mxu0 0.0
      %1084 = vmatprep.subr.mxu0 0.0
      %1085 = vmatpush1.msra.mxu0 0.0
      %1086 = vmatprep.subr.mxu0 0.0
      %1087 = vmatpush1.msra.mxu0 0.0
      %1088 = vmatprep.subr.mxu0 0.0
      %1089 = vmatpush1.msra.mxu0 0.0
      %1090 = vmatprep.subr.mxu0 0.0
      %1091 = vmatpush1.msra.mxu0 0.0
      %1092 = vmatprep.subr.mxu0 0.0
      %1093 = vmatpush1.msra.mxu0 0.0
      %1094 = vmatprep.subr.mxu0 0.0
      %1095 = vmatpush1.msra.mxu0 0.0
      %1096 = vmatprep.subr.mxu0 0.0
      %1097 = vmatpush1.msra.mxu0 0.0
      %1098 = vmatprep.subr.mxu0 0.0
      %1099 = vmatpush1.msra.mxu0 0.0
      %1100 = vmatprep.subr.mxu0 0.0
      %1101 = vmatpush1.msra.mxu0 0.0
      %1102 = vmatprep.subr.mxu0 0.0
      %1103 = vmatpush1.msra.mxu0 0.0
      %1104 = vmatprep.subr.mxu0 0.0
      %1105 = vmatpush1.msra.mxu0 0.0
      %1106 = vmatprep.subr.mxu0 0.0
      %1107 = vmatpush1.msra.mxu0 0.0
      %1108 = vmatprep.subr.mxu0 0.0
      %1109 = vmatpush1.msra.mxu0 0.0
      %1110 = vmatprep.subr.mxu0 0.0
      %1111 = vmatpush1.msra.mxu0 0.0
      %1112 = vmatprep.subr.mxu0 0.0
      %1113 = vmatpush1.msra.mxu0 0.0
      %1114 = vmatprep.subr.mxu0 0.0
      %1115 = vmatpush1.msra.mxu0 0.0
      %1116 = vmatprep.subr.mxu0 0.0
      %1117 = vmatpush1.msra.mxu0 0.0
      %1118 = vmatprep.subr.mxu0 0.0
      %1119 = vmatpush1.msra.mxu0 0.0
      %1120 = vmatprep.subr.mxu0 0.0
      %1121 = vmatpush1.msra.mxu0 0.0
      %1122 = vmatprep.subr.mxu0 0.0
      %1123 = vmatpush1.msra.mxu0 0.0
      %1124 = vmatprep.subr.mxu0 0.0
      %1125 = vmatpush1.msra.mxu0 0.0
      %1126 = vmatprep.subr.mxu0 0.0
      %1127 = vmatpush1.msra.mxu0 0.0
      %1128 = vmatprep.subr.mxu0 0.0
      %1129 = vmatpush1.msra.mxu0 0.0
      %1130 = vmatprep.subr.mxu0 0.0
      %1131 = vmatpush1.msra.mxu0 0.0
      %1132 = vmatprep.subr.mxu0 0.0
      %1133 = vmatpush1.msra.mxu0 0.0
      %1134 = vmatprep.mubr.f32.mxu0 0.0
      %1135 = vmatmul.mubr.f32.gmra.mrb[0].mxu0 %v1068
      %v1136 = vpop.f32.mrb[0].mxu0
      %v1137 = vadd.f32 %v53, %v1136
      %v1138 = vpop.f32.mrb[0].mxu0
      %1139 = vdwg.mxu0
      %1141 = vrot.lane.b32.xlu0 %v1062, 56
      %v1142 = vpop.permute.xlu0 %1141
      %v1143 = vsel %vm257, %v1142, 0
      %1145 = vmatprep.subr.mxu0 0.0
      %1146 = vmatpush1.msra.mxu0 %v40
      %1147 = vmatprep.subr.mxu0 0.0
      %1148 = vmatpush1.msra.mxu0 %v41
      %1149 = vmatprep.subr.mxu0 0.0
      %1150 = vmatpush1.msra.mxu0 %v42
      %1151 = vmatprep.subr.mxu0 0.0
      %1152 = vmatpush1.msra.mxu0 0.0
      %1153 = vmatprep.subr.mxu0 0.0
      %1154 = vmatpush1.msra.mxu0 0.0
      %1155 = vmatprep.subr.mxu0 0.0
      %1156 = vmatpush1.msra.mxu0 0.0
      %1157 = vmatprep.subr.mxu0 0.0
      %1158 = vmatpush1.msra.mxu0 0.0
      %1159 = vmatprep.subr.mxu0 0.0
      %1160 = vmatpush1.msra.mxu0 0.0
      %1161 = vmatprep.subr.mxu0 0.0
      %1162 = vmatpush1.msra.mxu0 0.0
      %1163 = vmatprep.subr.mxu0 0.0
      %1164 = vmatpush1.msra.mxu0 0.0
      %1165 = vmatprep.subr.mxu0 0.0
      %1166 = vmatpush1.msra.mxu0 0.0
      %1167 = vmatprep.subr.mxu0 0.0
      %1168 = vmatpush1.msra.mxu0 0.0
      %1169 = vmatprep.subr.mxu0 0.0
      %1170 = vmatpush1.msra.mxu0 0.0
      %1171 = vmatprep.subr.mxu0 0.0
      %1172 = vmatpush1.msra.mxu0 0.0
      %1173 = vmatprep.subr.mxu0 0.0
      %1174 = vmatpush1.msra.mxu0 0.0
      %1175 = vmatprep.subr.mxu0 0.0
      %1176 = vmatpush1.msra.mxu0 0.0
      %1177 = vmatprep.subr.mxu0 0.0
      %1178 = vmatpush1.msra.mxu0 0.0
      %1179 = vmatprep.subr.mxu0 0.0
      %1180 = vmatpush1.msra.mxu0 0.0
      %1181 = vmatprep.subr.mxu0 0.0
      %1182 = vmatpush1.msra.mxu0 0.0
      %1183 = vmatprep.subr.mxu0 0.0
      %1184 = vmatpush1.msra.mxu0 0.0
      %1185 = vmatprep.subr.mxu0 0.0
      %1186 = vmatpush1.msra.mxu0 0.0
      %1187 = vmatprep.subr.mxu0 0.0
      %1188 = vmatpush1.msra.mxu0 0.0
      %1189 = vmatprep.subr.mxu0 0.0
      %1190 = vmatpush1.msra.mxu0 0.0
      %1191 = vmatprep.subr.mxu0 0.0
      %1192 = vmatpush1.msra.mxu0 0.0
      %1193 = vmatprep.subr.mxu0 0.0
      %1194 = vmatpush1.msra.mxu0 0.0
      %1195 = vmatprep.subr.mxu0 0.0
      %1196 = vmatpush1.msra.mxu0 0.0
      %1197 = vmatprep.subr.mxu0 0.0
      %1198 = vmatpush1.msra.mxu0 0.0
      %1199 = vmatprep.subr.mxu0 0.0
      %1200 = vmatpush1.msra.mxu0 0.0
      %1201 = vmatprep.subr.mxu0 0.0
      %1202 = vmatpush1.msra.mxu0 0.0
      %1203 = vmatprep.subr.mxu0 0.0
      %1204 = vmatpush1.msra.mxu0 0.0
      %1205 = vmatprep.subr.mxu0 0.0
      %1206 = vmatpush1.msra.mxu0 0.0
      %1207 = vmatprep.subr.mxu0 0.0
      %1208 = vmatpush1.msra.mxu0 0.0
      %1209 = vmatprep.mubr.f32.mxu0 0.0
      %1210 = vmatmul.mubr.f32.gmra.mrb[0].mxu0 %v1143
      %v1211 = vpop.f32.mrb[0].mxu0
      %v1212 = vadd.f32 0.0, %v1211
      %v1213 = vpop.f32.mrb[0].mxu0
      %1214 = vdwg.mxu0
      %v1215 = vadd.f32 %v1137, %v1212
      %v1216 = vxor.u32 %v1215, 2147483648
      %v1217 = vmul.f32 %v1216, 1.442695
      %v1218 = vpow.pop %v1217
      %v1219 = vadd.f32 %v1218, 1.0
      %v1220 = vrcp.pop %v1219
      %v1221 = vmul.f32 1.0, %v1220
      %v1222 = vtanh.pop %v1215
      %v1223 = vmul.f32 %v1221, %v1056
      %1225 = vrot.lane.b32.xlu0 %v1222, 80
      %v1226 = vpop.permute.xlu0 %1225
      %v1228 = vmul.f32 %v1221, %v1226
      %1230 = vrot.lane.b32.xlu0 %v1228, 24
      %v1231 = vpop.permute.xlu0 %1230
      %v1233 = vadd.f32 %v1223, %v1231
      %v1234 = vtanh.pop %v1233
      %1236 = vrot.lane.b32.xlu0 %v1234, 48
      %v1237 = vpop.permute.xlu0 %1236
      %v1239 = vmul.f32 %v1221, %v1237
      %s1240 = sadd.s32 %s176, 7
      %s1241 = smul.u32 %s1240, 2
      %s1242 = scalar_lea.vmem %s0, %s1241
      %v1243 = vld [vmem:[%s1242] sm:$0x3]
      %v1245 = vsel %vm55, %v1243, 0
      %1247 = vmatprep.subr.mxu0 0.0
      %1248 = vmatpush1.msra.mxu0 %v61
      %1249 = vmatprep.subr.mxu0 0.0
      %1250 = vmatpush1.msra.mxu0 0.0
      %1251 = vmatprep.subr.mxu0 0.0
      %1252 = vmatpush1.msra.mxu0 0.0
      %1253 = vmatprep.subr.mxu0 0.0
      %1254 = vmatpush1.msra.mxu0 0.0
      %1255 = vmatprep.subr.mxu0 0.0
      %1256 = vmatpush1.msra.mxu0 0.0
      %1257 = vmatprep.subr.mxu0 0.0
      %1258 = vmatpush1.msra.mxu0 0.0
      %1259 = vmatprep.subr.mxu0 0.0
      %1260 = vmatpush1.msra.mxu0 0.0
      %1261 = vmatprep.subr.mxu0 0.0
      %1262 = vmatpush1.msra.mxu0 0.0
      %1263 = vmatprep.subr.mxu0 0.0
      %1264 = vmatpush1.msra.mxu0 0.0
      %1265 = vmatprep.subr.mxu0 0.0
      %1266 = vmatpush1.msra.mxu0 0.0
      %1267 = vmatprep.subr.mxu0 0.0
      %1268 = vmatpush1.msra.mxu0 0.0
      %1269 = vmatprep.subr.mxu0 0.0
      %1270 = vmatpush1.msra.mxu0 0.0
      %1271 = vmatprep.subr.mxu0 0.0
      %1272 = vmatpush1.msra.mxu0 0.0
      %1273 = vmatprep.subr.mxu0 0.0
      %1274 = vmatpush1.msra.mxu0 0.0
      %1275 = vmatprep.subr.mxu0 0.0
      %1276 = vmatpush1.msra.mxu0 0.0
      %1277 = vmatprep.subr.mxu0 0.0
      %1278 = vmatpush1.msra.mxu0 0.0
      %1279 = vmatprep.subr.mxu0 0.0
      %1280 = vmatpush1.msra.mxu0 0.0
      %1281 = vmatprep.subr.mxu0 0.0
      %1282 = vmatpush1.msra.mxu0 0.0
      %1283 = vmatprep.subr.mxu0 0.0
      %1284 = vmatpush1.msra.mxu0 0.0
      %1285 = vmatprep.subr.mxu0 0.0
      %1286 = vmatpush1.msra.mxu0 0.0
      %1287 = vmatprep.subr.mxu0 0.0
      %1288 = vmatpush1.msra.mxu0 0.0
      %1289 = vmatprep.subr.mxu0 0.0
      %1290 = vmatpush1.msra.mxu0 0.0
      %1291 = vmatprep.subr.mxu0 0.0
      %1292 = vmatpush1.msra.mxu0 0.0
      %1293 = vmatprep.subr.mxu0 0.0
      %1294 = vmatpush1.msra.mxu0 0.0
      %1295 = vmatprep.subr.mxu0 0.0
      %1296 = vmatpush1.msra.mxu0 0.0
      %1297 = vmatprep.subr.mxu0 0.0
      %1298 = vmatpush1.msra.mxu0 0.0
      %1299 = vmatprep.subr.mxu0 0.0
      %1300 = vmatpush1.msra.mxu0 0.0
      %1301 = vmatprep.subr.mxu0 0.0
      %1302 = vmatpush1.msra.mxu0 0.0
      %1303 = vmatprep.subr.mxu0 0.0
      %1304 = vmatpush1.msra.mxu0 0.0
      %1305 = vmatprep.subr.mxu0 0.0
      %1306 = vmatpush1.msra.mxu0 0.0
      %1307 = vmatprep.subr.mxu0 0.0
      %1308 = vmatpush1.msra.mxu0 0.0
      %1309 = vmatprep.subr.mxu0 0.0
      %1310 = vmatpush1.msra.mxu0 0.0
      %1311 = vmatprep.mubr.f32.mxu0 0.0
      %1312 = vmatmul.mubr.f32.gmra.mrb[0].mxu0 %v1245
      %v1313 = vpop.f32.mrb[0].mxu0
      %v1314 = vadd.f32 %v53, %v1313
      %v1315 = vpop.f32.mrb[0].mxu0
      %1316 = vdwg.mxu0
      %1318 = vrot.lane.b32.xlu0 %v1239, 56
      %v1319 = vpop.permute.xlu0 %1318
      %v1320 = vsel %vm257, %v1319, 0
      %1322 = vmatprep.subr.mxu0 0.0
      %1323 = vmatpush1.msra.mxu0 %v40
      %1324 = vmatprep.subr.mxu0 0.0
      %1325 = vmatpush1.msra.mxu0 %v41
      %1326 = vmatprep.subr.mxu0 0.0
      %1327 = vmatpush1.msra.mxu0 %v42
      %1328 = vmatprep.subr.mxu0 0.0
      %1329 = vmatpush1.msra.mxu0 0.0
      %1330 = vmatprep.subr.mxu0 0.0
      %1331 = vmatpush1.msra.mxu0 0.0
      %1332 = vmatprep.subr.mxu0 0.0
      %1333 = vmatpush1.msra.mxu0 0.0
      %1334 = vmatprep.subr.mxu0 0.0
      %1335 = vmatpush1.msra.mxu0 0.0
      %1336 = vmatprep.subr.mxu0 0.0
      %1337 = vmatpush1.msra.mxu0 0.0
      %1338 = vmatprep.subr.mxu0 0.0
      %1339 = vmatpush1.msra.mxu0 0.0
      %1340 = vmatprep.subr.mxu0 0.0
      %1341 = vmatpush1.msra.mxu0 0.0
      %1342 = vmatprep.subr.mxu0 0.0
      %1343 = vmatpush1.msra.mxu0 0.0
      %1344 = vmatprep.subr.mxu0 0.0
      %1345 = vmatpush1.msra.mxu0 0.0
      %1346 = vmatprep.subr.mxu0 0.0
      %1347 = vmatpush1.msra.mxu0 0.0
      %1348 = vmatprep.subr.mxu0 0.0
      %1349 = vmatpush1.msra.mxu0 0.0
      %1350 = vmatprep.subr.mxu0 0.0
      %1351 = vmatpush1.msra.mxu0 0.0
      %1352 = vmatprep.subr.mxu0 0.0
      %1353 = vmatpush1.msra.mxu0 0.0
      %1354 = vmatprep.subr.mxu0 0.0
      %1355 = vmatpush1.msra.mxu0 0.0
      %1356 = vmatprep.subr.mxu0 0.0
      %1357 = vmatpush1.msra.mxu0 0.0
      %1358 = vmatprep.subr.mxu0 0.0
      %1359 = vmatpush1.msra.mxu0 0.0
      %1360 = vmatprep.subr.mxu0 0.0
      %1361 = vmatpush1.msra.mxu0 0.0
      %1362 = vmatprep.subr.mxu0 0.0
      %1363 = vmatpush1.msra.mxu0 0.0
      %1364 = vmatprep.subr.mxu0 0.0
      %1365 = vmatpush1.msra.mxu0 0.0
      %1366 = vmatprep.subr.mxu0 0.0
      %1367 = vmatpush1.msra.mxu0 0.0
      %1368 = vmatprep.subr.mxu0 0.0
      %1369 = vmatpush1.msra.mxu0 0.0
      %1370 = vmatprep.subr.mxu0 0.0
      %1371 = vmatpush1.msra.mxu0 0.0
      %1372 = vmatprep.subr.mxu0 0.0
      %1373 = vmatpush1.msra.mxu0 0.0
      %1374 = vmatprep.subr.mxu0 0.0
      %1375 = vmatpush1.msra.mxu0 0.0
      %1376 = vmatprep.subr.mxu0 0.0
      %1377 = vmatpush1.msra.mxu0 0.0
      %1378 = vmatprep.subr.mxu0 0.0
      %1379 = vmatpush1.msra.mxu0 0.0
      %1380 = vmatprep.subr.mxu0 0.0
      %1381 = vmatpush1.msra.mxu0 0.0
      %1382 = vmatprep.subr.mxu0 0.0
      %1383 = vmatpush1.msra.mxu0 0.0
      %1384 = vmatprep.subr.mxu0 0.0
      %1385 = vmatpush1.msra.mxu0 0.0
      %1386 = vmatprep.mubr.f32.mxu0 0.0
      %1387 = vmatmul.mubr.f32.gmra.mrb[0].mxu0 %v1320
      %v1388 = vpop.f32.mrb[0].mxu0
      %v1389 = vadd.f32 0.0, %v1388
      %v1390 = vpop.f32.mrb[0].mxu0
      %1391 = vdwg.mxu0
      %v1392 = vadd.f32 %v1314, %v1389
      %v1393 = vxor.u32 %v1392, 2147483648
      %v1394 = vmul.f32 %v1393, 1.442695
      %v1395 = vpow.pop %v1394
      %v1396 = vadd.f32 %v1395, 1.0
      %v1397 = vrcp.pop %v1396
      %v1398 = vmul.f32 1.0, %v1397
      %v1399 = vtanh.pop %v1392
      %v1400 = vmul.f32 %v1398, %v1233
      %1402 = vrot.lane.b32.xlu0 %v1399, 80
      %v1403 = vpop.permute.xlu0 %1402
      %v1405 = vmul.f32 %v1398, %v1403
      %1407 = vrot.lane.b32.xlu0 %v1405, 24
      %v1408 = vpop.permute.xlu0 %1407
      %v1410 = vadd.f32 %v1400, %v1408
      %v1411 = vtanh.pop %v1410
      %1413 = vrot.lane.b32.xlu0 %v1411, 48
      %v1414 = vpop.permute.xlu0 %1413
      %v1416 = vmul.f32 %v1398, %v1414
      %s1417 = sadd.s32 %s176, 8
      %s1418 = smul.u32 %s1417, 2
      %s1419 = scalar_lea.vmem %s0, %s1418
      %v1420 = vld [vmem:[%s1419] sm:$0x3]
      %v1422 = vsel %vm55, %v1420, 0
      %1424 = vmatprep.subr.mxu0 0.0
      %1425 = vmatpush1.msra.mxu0 %v61
      %1426 = vmatprep.subr.mxu0 0.0
      %1427 = vmatpush1.msra.mxu0 0.0
      %1428 = vmatprep.subr.mxu0 0.0
      %1429 = vmatpush1.msra.mxu0 0.0
      %1430 = vmatprep.subr.mxu0 0.0
      %1431 = vmatpush1.msra.mxu0 0.0
      %1432 = vmatprep.subr.mxu0 0.0
      %1433 = vmatpush1.msra.mxu0 0.0
      %1434 = vmatprep.subr.mxu0 0.0
      %1435 = vmatpush1.msra.mxu0 0.0
      %1436 = vmatprep.subr.mxu0 0.0
      %1437 = vmatpush1.msra.mxu0 0.0
      %1438 = vmatprep.subr.mxu0 0.0
      %1439 = vmatpush1.msra.mxu0 0.0
      %1440 = vmatprep.subr.mxu0 0.0
      %1441 = vmatpush1.msra.mxu0 0.0
      %1442 = vmatprep.subr.mxu0 0.0
      %1443 = vmatpush1.msra.mxu0 0.0
      %1444 = vmatprep.subr.mxu0 0.0
      %1445 = vmatpush1.msra.mxu0 0.0
      %1446 = vmatprep.subr.mxu0 0.0
      %1447 = vmatpush1.msra.mxu0 0.0
      %1448 = vmatprep.subr.mxu0 0.0
      %1449 = vmatpush1.msra.mxu0 0.0
      %1450 = vmatprep.subr.mxu0 0.0
      %1451 = vmatpush1.msra.mxu0 0.0
      %1452 = vmatprep.subr.mxu0 0.0
      %1453 = vmatpush1.msra.mxu0 0.0
      %1454 = vmatprep.subr.mxu0 0.0
      %1455 = vmatpush1.msra.mxu0 0.0
      %1456 = vmatprep.subr.mxu0 0.0
      %1457 = vmatpush1.msra.mxu0 0.0
      %1458 = vmatprep.subr.mxu0 0.0
      %1459 = vmatpush1.msra.mxu0 0.0
      %1460 = vmatprep.subr.mxu0 0.0
      %1461 = vmatpush1.msra.mxu0 0.0
      %1462 = vmatprep.subr.mxu0 0.0
      %1463 = vmatpush1.msra.mxu0 0.0
      %1464 = vmatprep.subr.mxu0 0.0
      %1465 = vmatpush1.msra.mxu0 0.0
      %1466 = vmatprep.subr.mxu0 0.0
      %1467 = vmatpush1.msra.mxu0 0.0
      %1468 = vmatprep.subr.mxu0 0.0
      %1469 = vmatpush1.msra.mxu0 0.0
      %1470 = vmatprep.subr.mxu0 0.0
      %1471 = vmatpush1.msra.mxu0 0.0
      %1472 = vmatprep.subr.mxu0 0.0
      %1473 = vmatpush1.msra.mxu0 0.0
      %1474 = vmatprep.subr.mxu0 0.0
      %1475 = vmatpush1.msra.mxu0 0.0
      %1476 = vmatprep.subr.mxu0 0.0
      %1477 = vmatpush1.msra.mxu0 0.0
      %1478 = vmatprep.subr.mxu0 0.0
      %1479 = vmatpush1.msra.mxu0 0.0
      %1480 = vmatprep.subr.mxu0 0.0
      %1481 = vmatpush1.msra.mxu0 0.0
      %1482 = vmatprep.subr.mxu0 0.0
      %1483 = vmatpush1.msra.mxu0 0.0
      %1484 = vmatprep.subr.mxu0 0.0
      %1485 = vmatpush1.msra.mxu0 0.0
      %1486 = vmatprep.subr.mxu0 0.0
      %1487 = vmatpush1.msra.mxu0 0.0
      %1488 = vmatprep.mubr.f32.mxu0 0.0
      %1489 = vmatmul.mubr.f32.gmra.mrb[0].mxu0 %v1422
      %v1490 = vpop.f32.mrb[0].mxu0
      %v1491 = vadd.f32 %v53, %v1490
      %v1492 = vpop.f32.mrb[0].mxu0
      %1493 = vdwg.mxu0
      %1495 = vrot.lane.b32.xlu0 %v1416, 56
      %v1496 = vpop.permute.xlu0 %1495
      %v1497 = vsel %vm257, %v1496, 0
      %1499 = vmatprep.subr.mxu0 0.0
      %1500 = vmatpush1.msra.mxu0 %v40
      %1501 = vmatprep.subr.mxu0 0.0
      %1502 = vmatpush1.msra.mxu0 %v41
      %1503 = vmatprep.subr.mxu0 0.0
      %1504 = vmatpush1.msra.mxu0 %v42
      %1505 = vmatprep.subr.mxu0 0.0
      %1506 = vmatpush1.msra.mxu0 0.0
      %1507 = vmatprep.subr.mxu0 0.0
      %1508 = vmatpush1.msra.mxu0 0.0
      %1509 = vmatprep.subr.mxu0 0.0
      %1510 = vmatpush1.msra.mxu0 0.0
      %1511 = vmatprep.subr.mxu0 0.0
      %1512 = vmatpush1.msra.mxu0 0.0
      %1513 = vmatprep.subr.mxu0 0.0
      %1514 = vmatpush1.msra.mxu0 0.0
      %1515 = vmatprep.subr.mxu0 0.0
      %1516 = vmatpush1.msra.mxu0 0.0
      %1517 = vmatprep.subr.mxu0 0.0
      %1518 = vmatpush1.msra.mxu0 0.0
      %1519 = vmatprep.subr.mxu0 0.0
      %1520 = vmatpush1.msra.mxu0 0.0
      %1521 = vmatprep.subr.mxu0 0.0
      %1522 = vmatpush1.msra.mxu0 0.0
      %1523 = vmatprep.subr.mxu0 0.0
      %1524 = vmatpush1.msra.mxu0 0.0
      %1525 = vmatprep.subr.mxu0 0.0
      %1526 = vmatpush1.msra.mxu0 0.0
      %1527 = vmatprep.subr.mxu0 0.0
      %1528 = vmatpush1.msra.mxu0 0.0
      %1529 = vmatprep.subr.mxu0 0.0
      %1530 = vmatpush1.msra.mxu0 0.0
      %1531 = vmatprep.subr.mxu0 0.0
      %1532 = vmatpush1.msra.mxu0 0.0
      %1533 = vmatprep.subr.mxu0 0.0
      %1534 = vmatpush1.msra.mxu0 0.0
      %1535 = vmatprep.subr.mxu0 0.0
      %1536 = vmatpush1.msra.mxu0 0.0
      %1537 = vmatprep.subr.mxu0 0.0
      %1538 = vmatpush1.msra.mxu0 0.0
      %1539 = vmatprep.subr.mxu0 0.0
      %1540 = vmatpush1.msra.mxu0 0.0
      %1541 = vmatprep.subr.mxu0 0.0
      %1542 = vmatpush1.msra.mxu0 0.0
      %1543 = vmatprep.subr.mxu0 0.0
      %1544 = vmatpush1.msra.mxu0 0.0
      %1545 = vmatprep.subr.mxu0 0.0
      %1546 = vmatpush1.msra.mxu0 0.0
      %1547 = vmatprep.subr.mxu0 0.0
      %1548 = vmatpush1.msra.mxu0 0.0
      %1549 = vmatprep.subr.mxu0 0.0
      %1550 = vmatpush1.msra.mxu0 0.0
      %1551 = vmatprep.subr.mxu0 0.0
      %1552 = vmatpush1.msra.mxu0 0.0
      %1553 = vmatprep.subr.mxu0 0.0
      %1554 = vmatpush1.msra.mxu0 0.0
      %1555 = vmatprep.subr.mxu0 0.0
      %1556 = vmatpush1.msra.mxu0 0.0
      %1557 = vmatprep.subr.mxu0 0.0
      %1558 = vmatpush1.msra.mxu0 0.0
      %1559 = vmatprep.subr.mxu0 0.0
      %1560 = vmatpush1.msra.mxu0 0.0
      %1561 = vmatprep.subr.mxu0 0.0
      %1562 = vmatpush1.msra.mxu0 0.0
      %1563 = vmatprep.mubr.f32.mxu0 0.0
      %1564 = vmatmul.mubr.f32.gmra.mrb[0].mxu0 %v1497
      %v1565 = vpop.f32.mrb[0].mxu0
      %v1566 = vadd.f32 0.0, %v1565
      %v1567 = vpop.f32.mrb[0].mxu0
      %1568 = vdwg.mxu0
      %v1569 = vadd.f32 %v1491, %v1566
      %v1570 = vxor.u32 %v1569, 2147483648
      %v1571 = vmul.f32 %v1570, 1.442695
      %v1572 = vpow.pop %v1571
      %v1573 = vadd.f32 %v1572, 1.0
      %v1574 = vrcp.pop %v1573
      %v1575 = vmul.f32 1.0, %v1574
      %v1576 = vtanh.pop %v1569
      %v1577 = vmul.f32 %v1575, %v1410
      %1579 = vrot.lane.b32.xlu0 %v1576, 80
      %v1580 = vpop.permute.xlu0 %1579
      %v1582 = vmul.f32 %v1575, %v1580
      %1584 = vrot.lane.b32.xlu0 %v1582, 24
      %v1585 = vpop.permute.xlu0 %1584
      %v1587 = vadd.f32 %v1577, %v1585
      %v1588 = vtanh.pop %v1587
      %1590 = vrot.lane.b32.xlu0 %v1588, 48
      %v1591 = vpop.permute.xlu0 %1590
      %v1593 = vmul.f32 %v1575, %v1591
      %1594 = vrot.lane.b32.xlu0 %v354, 44
      %v1595 = vpop.permute.xlu0 %1594
      %1598 = vrot.lane.b32.xlu0 %v708, 68
      %v1599 = vpop.permute.xlu0 %1598
      %1601 = vrot.lane.b32.xlu0 %v885, 80
      %v1602 = vpop.permute.xlu0 %1601
      %1604 = vrot.lane.b32.xlu0 %v1062, 92
      %v1605 = vpop.permute.xlu0 %1604
      %1607 = vrot.lane.b32.xlu0 %v1239, 104
      %v1608 = vpop.permute.xlu0 %1607
      %1610 = vrot.lane.b32.xlu0 %v1416, 116
      %v1611 = vpop.permute.xlu0 %1610
      %vm1613 = vcmask 97280
      %v1614 = vsel %vm1613, %v1595, %v611
      %v1615 = vsel %vm257, %v1614, %v1599
      %vm1616 = vcmask 293888
      %v1617 = vsel %vm1616, %v1615, %v1602
      %vm1618 = vcmask 392192
      %v1619 = vsel %vm1618, %v1617, %v1605
      %vm1620 = vcmask 490496
      %v1621 = vsel %vm1620, %v1619, %v1608
      %vm1622 = vcmask 588800
      %v1623 = vsel %vm1622, %v1621, %v1611
      %vm1624 = vcmask 687104
      %v1625 = vsel %vm1624, %v1623, %v1593
      %v1626 = vxor.u32 %v1625, 2147483648
      %v1627 = vmul.f32 %v1626, 1.442695
      %v1628 = vpow.pop %v1627
      %v1629 = vadd.f32 %v1628, 1.0
      %v1630 = vrcp.pop %v1629
      %v1631 = vmul.f32 1.0, %v1630
      %s1632 = smul.u32 %s167, 24
      %s1633 = smul.addr %s1632, 8
      %s1634 = scalar_lea.vmem [#allocation2], %s1633
      %v1635 = vld [vmem:[%s1634] sm:$0xff]
      %v1636 = vld [vmem:[%s1634 + $0x8] sm:$0xff]
      %v1637 = vld [vmem:[%s1634 + $0x10] sm:$0xff]
      %v1638 = vld [vmem:[%s1634 + $0x18] sm:$0xff]
      %v1639 = vld [vmem:[%s1634 + $0x20] sm:$0xff]
      %v1640 = vld [vmem:[%s1634 + $0x28] sm:$0xff]
      %v1641 = vld [vmem:[%s1634 + $0x30] sm:$0xff]
      %v1642 = vld [vmem:[%s1634 + $0x38] sm:$0xff]
      %v1643 = vld [vmem:[%s1634 + $0x40] sm:$0xff]
      %v1644 = vld [vmem:[%s1634 + $0x48] sm:$0xff]
      %v1645 = vld [vmem:[%s1634 + $0x50] sm:$0xff]
      %v1646 = vld [vmem:[%s1634 + $0x58] sm:$0xff]
      %v1647 = vld [vmem:[%s1634 + $0x60] sm:$0xff]
      %v1648 = vld [vmem:[%s1634 + $0x68] sm:$0xff]
      %v1649 = vld [vmem:[%s1634 + $0x70] sm:$0xff]
      %v1650 = vld [vmem:[%s1634 + $0x78] sm:$0xff]
      %v1651 = vld [vmem:[%s1634 + $0x80] sm:$0xff]
      %v1652 = vld [vmem:[%s1634 + $0x88] sm:$0xff]
      %v1653 = vld [vmem:[%s1634 + $0x90] sm:$0xff]
      %v1654 = vld [vmem:[%s1634 + $0x98] sm:$0xff]
      %v1655 = vld [vmem:[%s1634 + $0xa0] sm:$0xff]
      %v1656 = vld [vmem:[%s1634 + $0xa8] sm:$0xff]
      %v1657 = vld [vmem:[%s1634 + $0xb0] sm:$0xff]
      %v1658 = vld [vmem:[%s1634 + $0xb8] sm:$0xff]
      %vm1659 = vcmask 785408
      %v1661 = vsel %vm1659, %v1631, 0
      %1663 = vmatprep.subr.mxu0 %v1636
      %1664 = vmatpush1.msra.mxu0 %v1635
      %1665 = vmatprep.subr.mxu0 %v1638
      %1666 = vmatpush1.msra.mxu0 %v1637
      %1667 = vmatprep.subr.mxu0 %v1640
      %1668 = vmatpush1.msra.mxu0 %v1639
      %1669 = vmatprep.subr.mxu0 %v1642
      %1670 = vmatpush1.msra.mxu0 %v1641
      %1671 = vmatprep.subr.mxu0 %v1644
      %1672 = vmatpush1.msra.mxu0 %v1643
      %1673 = vmatprep.subr.mxu0 %v1646
      %1674 = vmatpush1.msra.mxu0 %v1645
      %1675 = vmatprep.subr.mxu0 %v1648
      %1676 = vmatpush1.msra.mxu0 %v1647
      %1677 = vmatprep.subr.mxu0 %v1650
      %1678 = vmatpush1.msra.mxu0 %v1649
      %1679 = vmatprep.subr.mxu0 %v1652
      %1680 = vmatpush1.msra.mxu0 %v1651
      %1681 = vmatprep.subr.mxu0 %v1654
      %1682 = vmatpush1.msra.mxu0 %v1653
      %1683 = vmatprep.subr.mxu0 %v1656
      %1684 = vmatpush1.msra.mxu0 %v1655
      %1685 = vmatprep.subr.mxu0 %v1658
      %1686 = vmatpush1.msra.mxu0 %v1657
      %1687 = vmatprep.subr.mxu0 0.0
      %1688 = vmatpush1.msra.mxu0 0.0
      %1689 = vmatprep.subr.mxu0 0.0
      %1690 = vmatpush1.msra.mxu0 0.0
      %1691 = vmatprep.subr.mxu0 0.0
      %1692 = vmatpush1.msra.mxu0 0.0
      %1693 = vmatprep.subr.mxu0 0.0
      %1694 = vmatpush1.msra.mxu0 0.0
      %1695 = vmatprep.subr.mxu0 0.0
      %1696 = vmatpush1.msra.mxu0 0.0
      %1697 = vmatprep.subr.mxu0 0.0
      %1698 = vmatpush1.msra.mxu0 0.0
      %1699 = vmatprep.subr.mxu0 0.0
      %1700 = vmatpush1.msra.mxu0 0.0
      %1701 = vmatprep.subr.mxu0 0.0
      %1702 = vmatpush1.msra.mxu0 0.0
      %1703 = vmatprep.subr.mxu0 0.0
      %1704 = vmatpush1.msra.mxu0 0.0
      %1705 = vmatprep.subr.mxu0 0.0
      %1706 = vmatpush1.msra.mxu0 0.0
      %1707 = vmatprep.subr.mxu0 0.0
      %1708 = vmatpush1.msra.mxu0 0.0
      %1709 = vmatprep.subr.mxu0 0.0
      %1710 = vmatpush1.msra.mxu0 0.0
      %1711 = vmatprep.subr.mxu0 0.0
      %1712 = vmatpush1.msra.mxu0 0.0
      %1713 = vmatprep.subr.mxu0 0.0
      %1714 = vmatpush1.msra.mxu0 0.0
      %1715 = vmatprep.subr.mxu0 0.0
      %1716 = vmatpush1.msra.mxu0 0.0
      %1717 = vmatprep.subr.mxu0 0.0
      %1718 = vmatpush1.msra.mxu0 0.0
      %1719 = vmatprep.subr.mxu0 0.0
      %1720 = vmatpush1.msra.mxu0 0.0
      %1721 = vmatprep.subr.mxu0 0.0
      %1722 = vmatpush1.msra.mxu0 0.0
      %1723 = vmatprep.subr.mxu0 0.0
      %1724 = vmatpush1.msra.mxu0 0.0
      %1725 = vmatprep.subr.mxu0 0.0
      %1726 = vmatpush1.msra.mxu0 0.0
      %1727 = vmatprep.mubr.f32.mxu0 0.0
      %1728 = vmatmul.mubr.f32.gmra.mrb[0].mxu0 %v1661
      %v1729 = vpop.f32.mrb[0].mxu0
      %v1730 = vadd.f32 0.0, %v1729
      %v1731 = vpop.f32.mrb[0].mxu0
      %v1732 = vadd.f32 0.0, %v1731
      %1733 = vdwg.mxu0
      %v1734 = vadd.f32 %v174, %v1730
      %v1735 = vadd.f32 %v175, %v1732
    $region34: #{net_forward.1} parent=1 // loop_footer
      %s171 = sadd.s32 1, %s167
    $region35: #{net_forward.1} parent=1 // loop_footer_branch
      %166 = sbr.rel target = $region31
    $region36: #{net_forward.1} parent=1 // loop_exit
      _
    %v1736 = vld [vmem:[%s5] sm:$0x3]
    %v1738 = vlaneseq
    %v1739 = vshrl.u32 %v1738, 7
    %v1740 = vsub.s32 0, %v1739
    %v1741 = vrot.slane %v1736, %v1740
    %v1742 = vlaneseq
    %v1743 = vshrl.u32 %v1742, 7
    %v1744 = vsub.s32 1, %v1743
    %v1745 = vrot.slane %v1736, %v1744
    %v1748 = vadd.f32 %v174, %v1741
    %v1749 = vadd.f32 %v175, %v1745
    %v1752 = vcombine.low %v1748, %v1749
    %v1754 = vunpack.c.l.s4 1983009808
    %v1755 = vunpack.c.0.s8 %v1754
    %v1756 = vlaneseq
    %v1757 = vshrl.u32 %v1756, 7
    %v1758 = vsub.s32 %v1755, %v1757
    %v1759 = vrot.slane %v1752, %v1758
    %vm1761 = vcmask 1041408
    %vm1762 = vcmask 715778
    %vm1763 = vmor %vm1762, %vm1761
    %1764 = vst.msk [vmem:[#allocation5] sm:$0xf] %vm1763, %v1759
    // Predicated region
    $region37: #{net_forward.1} parent=1 // pred_check
      _
    $region38: #{net_forward.1} parent=1 // pred_check_branch
      %1766 = sbr.rel (0) target = $region40
    $region39: #{net_forward.1} parent=1 // pred_region
      %s1768 = ssub.s32 64, 64
      %1769 = vsyncadd [#allocation4], %s1768
      %s1771 = sshll.u32 [#allocation5], 4
      %s1772 = int_to_ptr.vmem [resolvable:$true] %s1771
      %1774 = dma.vmem_to_hbm [thread:$0]  %s1772, 64, %s6, [#allocation4]
    $region40: #{net_forward.1} parent=1 // pred_fallthru
      _
    // Predicated region
    $region41: #{net_forward.1} parent=1 // pred_check
      _
    $region42: #{net_forward.1} parent=1 // pred_check_branch
      %1776 = sbr.rel (0) target = $region44
    $region43: #{net_forward.1} parent=1 // pred_region
      %1777 = dma.done [#allocation4], 64
    $region44: #{net_forward.1} parent=1 // pred_fallthru
      _
    %1778 = vsyncpa [#allocation3], 1
    %1779 = vsyncpa [#allocation4], 1

</llo_original>
